<compile_context>
chip_gen: v7x
topology: tpu7x:2x2x1
jax: 0.10.0
libtpu: 0.0.40
codegen_flags: <defaults>
</compile_context>

<pallas_src>
import functools

import jax
import jax.numpy as jnp
import numpy as np
from jax.experimental import pallas as pl
from jax.experimental.pallas import tpu as pltpu


# ----------------------------------------------------------------------------- utils
def _largest_divisor_leq(n, cap):
    cap = max(1, min(n, cap))
    for d in range(cap, 0, -1):
        if n % d == 0:
            return d
    return 1


def _roll_probe_kernel(x_ref, o_ref):
    o_ref[...] = pltpu.roll(x_ref[...], 1, 1)


@functools.lru_cache(maxsize=1)
def _pltpu_roll_matches_jnp_roll():
    """One-time probe of pltpu.roll's shift convention (cached across calls)."""
    try:
        x = jnp.arange(8 * 128, dtype=jnp.float32).reshape(8, 128)
        got = pl.pallas_call(
            _roll_probe_kernel,
            out_shape=jax.ShapeDtypeStruct((8, 128), jnp.float32))(x)
        return bool(jnp.array_equal(got, jnp.roll(x, 1, axis=1)))
    except Exception:
        return True   # believed (and documented) convention: same as jnp.roll


def _lane_shift(x, s, roll_like_jnp):
    """Return y with y[..., p] = x[..., (p + s) % n] along the last (lane) axis."""
    n = x.shape[-1]
    s = s % n
    if s == 0:
        return x
    amt = (n - s) if roll_like_jnp else s
    return pltpu.roll(x, amt, x.ndim - 1)


# ---------------------------------------------------------------------------- kernel
def _spatial_attention_kernel(w_ref, b_ref, hmask_ref, wmask_ref, x_ref, o_ref, *,
                              W, ksize, bsub, c_chunk, roll_like_jnp):
    pad = (ksize - 1) // 2
    k2 = ksize * ksize
    Bb, C, HWp = x_ref.shape
    n_sub = Bb // bsub
    c_starts = tuple(range(0, C, c_chunk))
    inv_c = 1.0 / C

    def process(b0):
        # ---- channel mean / max, streamed over C chunks (bounds vreg pressure) ----
        s = m = None
        for c0 in c_starts:
            xc = x_ref[pl.ds(b0, bsub), c0:c0 + c_chunk, :].astype(jnp.float32)
            cs = jnp.sum(xc, axis=1)                        # (bsub, HWp)
            cm = jnp.max(xc, axis=1)
            if s is None:
                s, m = cs, cm
            else:
                s, m = s + cs, jnp.maximum(m, cm)
        avg = s * inv_c
        mx = m

        # ---- factorized 7x7 'SAME' conv (zero padding):
        #      h-pass rolls + hmask, column FMAs, w-pass rolls + wmask.        ----
        cols = [None] * ksize
        for kh in range(ksize):
            dh = kh - pad
            hm = hmask_ref[kh:kh + 1, :]                    # (1, HWp) in {0, 1}
            pa = hm * _lane_shift(avg, dh * W, roll_like_jnp)
            pm = hm * _lane_shift(mx, dh * W, roll_like_jnp)
            for kw in range(ksize):
                c = w_ref[kh * ksize + kw] * pa + w_ref[k2 + kh * ksize + kw] * pm
                cols[kw] = c if cols[kw] is None else cols[kw] + c
        accs = [None, None]
        for kw in range(ksize):
            dw = kw - pad
            t = wmask_ref[kw:kw + 1, :] * _lane_shift(cols[kw], dw, roll_like_jnp)
            j = kw & 1
            accs[j] = t if accs[j] is None else accs[j] + t
        att = jax.nn.sigmoid(accs[0] + accs[1] + b_ref[0])  # (bsub, HWp), EUP
        att3 = att[:, None, :]

        # ---- out = x * att, streamed over C chunks (lane-dense, unmasked stores) ----
        for c0 in c_starts:
            xc = x_ref[pl.ds(b0, bsub), c0:c0 + c_chunk, :]
            o_ref[pl.ds(b0, bsub), c0:c0 + c_chunk, :] = (
                xc.astype(jnp.float32) * att3).astype(o_ref.dtype)

    if n_sub == 1:
        process(0)
    else:
        def body(i, carry):
            process(pl.multiple_of(i * bsub, bsub))
            return carry
        jax.lax.fori_loop(0, n_sub, body, 0, unroll=n_sub <= 4)


# --------------------------------------------------------------------------- wrapper
def spatial_attention_pallas(x, weight, bias, kernel_size=7, *, block_b=None,
                             donate_x=False):
    """x: (B, C, H, W); weight: (1, 2, k, k); bias: (1,).  Returns x * att."""
    assert kernel_size % 2 == 1, "the module's SAME conv requires an odd kernel size"
    B, C, H, W = x.shape
    ksize = int(kernel_size)
    pad = (ksize - 1) // 2
    HW = H * W
    HWp = ((HW + 127) // 128) * 128       # lane-dense / roll-aligned flattened width

    # Lane-dense layout: flatten spatial dims onto the lane axis; zero-pad to a
    # multiple of 128 so every in-kernel roll / load / store is on dense lanes.
    x2 = x.reshape(B, C, HW)
    if HWp != HW:
        # TODO(synk): an in-kernel masked tail would avoid this extra HBM copy.
        x2 = jnp.pad(x2, ((0, 0), (0, 0), (0, HWp - HW)))

    # Conv params as flat scalar tables in SMEM: [avg-plane taps | max-plane taps].
    w_flat = jnp.asarray(weight, jnp.float32).reshape(-1)   # (2*k*k,)
    b_flat = jnp.asarray(bias, jnp.float32).reshape(-1)     # (1,)

    # {0,1} image-border validity masks per kernel row / column offset (host-side;
    # applied as multiplies inside the factorized conv; pad lanes are zeroed).
    p = np.arange(HWp)
    valid = p < HW
    pc = np.minimum(p, HW - 1)
    hc, wc = pc // W, pc % W
    hmask = np.stack([(valid & (hc >= -(kh - pad)) & (hc < H - (kh - pad)))
                      for kh in range(ksize)]).astype(np.float32)
    wmask = np.stack([(valid & (wc >= -(kw - pad)) & (wc < W - (kw - pad)))
                      for kw in range(ksize)]).astype(np.float32)
    hmask, wmask = jnp.asarray(hmask), jnp.asarray(wmask)

    # ---- block sizing from the real footprint and this generation's VMEM ----
    itemsize = x.dtype.itemsize
    sub_gran = max(8, 32 // itemsize)                 # sublane padding of the C axis
    c_pad = ((C + sub_gran - 1) // sub_gran) * sub_gran
    bytes_per_b = c_pad * HWp * itemsize
    try:
        vmem_cap = int(pltpu.get_tpu_info().vmem_capacity_bytes)
    except Exception:
        vmem_cap = 64 * 1024 * 1024                   # conservative (v7x per-core)

    if block_b is None:
        # in + out blocks, double-buffered => 4 live copies.  A few MiB per block
        # already amortizes the ~0.35us/grid-step overhead; cap well under VMEM.
        budget = min(vmem_cap // 2, 48 * 1024 * 1024)
        block_b = max(1, budget // (4 * bytes_per_b))
    block_b = max(1, min(int(block_b), B))
    if B >= 2:
        # >= 2 grid steps so a 2-TensorCore chip (v7x) can shard the batch axis.
        block_b = max(1, min(block_b, B // 2))
    # TODO(synk): support a ragged final block instead of shrinking to a divisor of B.
    while B % block_b:
        block_b -= 1
    grid = (B // block_b,)

    # In-kernel sub-tiling: conv on <=8-sublane batch groups, C streamed in chunks.
    bsub = _largest_divisor_leq(block_b, 8)
    c_chunk = _largest_divisor_leq(C, 8 if C <= 128 else 64)

    vmem_limit = int(max(32 * 1024 * 1024, (vmem_cap * 3) // 4))

    kernel = functools.partial(
        _spatial_attention_kernel, W=W, ksize=ksize, bsub=bsub, c_chunk=c_chunk,
        roll_like_jnp=_pltpu_roll_matches_jnp_roll())

    out2 = pl.pallas_call(
        kernel,
        out_shape=jax.ShapeDtypeStruct((B, C, HWp), x.dtype),
        grid=grid,
        in_specs=[
            pl.BlockSpec(memory_space=pltpu.MemorySpace.SMEM),       # conv weights
            pl.BlockSpec(memory_space=pltpu.MemorySpace.SMEM),       # conv bias
            pl.BlockSpec((ksize, HWp), lambda i: (0, 0)),            # h-offset masks
            pl.BlockSpec((ksize, HWp), lambda i: (0, 0)),            # w-offset masks
            pl.BlockSpec((block_b, C, HWp), lambda i: (i, 0, 0)),    # x batch block
        ],
        out_specs=pl.BlockSpec((block_b, C, HWp), lambda i: (i, 0, 0)),
        # out = x * att is a pure elementwise overwrite; callers that no longer need
        # x (or the padded copy of it) can alias it onto the output.
        input_output_aliases=({4: 0} if donate_x else {}),
        compiler_params=pltpu.CompilerParams(
            dimension_semantics=("parallel",),
            vmem_limit_bytes=vmem_limit,
        ),
    )(w_flat, b_flat, hmask, wmask, x2)

    out2 = out2[..., :HW] if HWp != HW else out2
    return out2.reshape(B, C, H, W)


# ------------------------------------------------------------------------- reference
def spatial_attention_ref(x, weight, bias):
    """Pure-JAX reference matching the PyTorch module."""
    avg = jnp.mean(x, axis=1, keepdims=True)
    mx = jnp.max(x, axis=1, keepdims=True)
    att = jnp.concatenate([avg, mx], axis=1)
    att = jax.lax.conv_general_dilated(
        att, weight, window_strides=(1, 1), padding="SAME",
        dimension_numbers=("NCHW", "OIHW", "NCHW"))
    att = att + bias.reshape(1, -1, 1, 1)
    att = jax.nn.sigmoid(att)
    return x * att


# ------------------------------------------------------------------------------ main
if __name__ == "__main__":
    root = jax.random.PRNGKey(0)

    def run_case(B, C, H, W, ksize, key):
        kx, kw, kb = jax.random.split(key, 3)
        x = jax.random.normal(kx, (B, C, H, W), dtype=jnp.float32)
        fan_in = 2 * ksize * ksize
        bound = 1.0 / np.sqrt(fan_in)
        weight = jax.random.uniform(kw, (1, 2, ksize, ksize), jnp.float32, -bound, bound)
        bias = jax.random.uniform(kb, (1,), jnp.float32, -bound, bound)
        out = jax.block_until_ready(
            spatial_attention_pallas(x, weight, bias, kernel_size=ksize))
        ref = spatial_attention_ref(x, weight, bias)
        np.testing.assert_allclose(np.asarray(out), np.asarray(ref),
                                   rtol=2e-4, atol=2e-5)

    keys = jax.random.split(root, 3)
    run_case(2, 4, 16, 16, 7, keys[0])    # canonical small shape (HW = 256)
    run_case(3, 5, 7, 9, 7, keys[1])      # H != W, HW = 63 (pad/mask path), odd B, C
    run_case(32, 12, 14, 14, 7, keys[2])  # exercises batch sub-chunk + C-chunk loops

    print("KERNEL_OK")
</pallas_src>

<mosaic_0001>
module attributes {stable_mosaic.version = 11 : i64} {
  func.func @_roll_probe_kernel(%arg0: memref<8x128xf32, #tpu.memory_space<vmem>>, %arg1: memref<8x128xf32, #tpu.memory_space<vmem>>) attributes {dimension_semantics = [], scalar_prefetch = 0 : i64, scratch_operands = 0 : i64, tpu.core_type = #tpu.core_type<tc>} {
    %c0 = arith.constant 0 : index
    %c0_0 = arith.constant 0 : index
    %0 = vector.load %arg0[%c0, %c0_0] : memref<8x128xf32, #tpu.memory_space<vmem>>, vector<8x128xf32>
    %c1_i32 = arith.constant 1 : i32
    %1 = tpu.dynamic_rotate %0 by %c1_i32 dim 1 : vector<8x128xf32>, i32 -> vector<8x128xf32>
    %c0_1 = arith.constant 0 : index
    %c0_2 = arith.constant 0 : index
    %2 = vector.load %arg1[%c0_1, %c0_2] : memref<8x128xf32, #tpu.memory_space<vmem>>, vector<8x128xf32>
    tpu.vector_store %arg1[%c0_1, %c0_2], %1 {strides = array<i32>} : memref<8x128xf32, #tpu.memory_space<vmem>>, vector<8x128xf32>,
    return
  }
}

module attributes {stable_mosaic.version = 11 : i64} {
  func.func @_spatial_attention_kernel(%arg0: i32, %arg1: memref<98xf32, #tpu.memory_space<smem>>, %arg2: memref<1xf32, #tpu.memory_space<smem>>, %arg3: memref<7x256xf32, #tpu.memory_space<vmem>>, %arg4: memref<7x256xf32, #tpu.memory_space<vmem>>, %arg5: memref<1x4x256xf32, #tpu.memory_space<vmem>>, %arg6: memref<1x4x256xf32, #tpu.memory_space<vmem>>) attributes {dimension_semantics = [#tpu.dimension_semantics<parallel>], iteration_bounds = array<i64: 2>, scalar_prefetch = 0 : i64, scratch_operands = 0 : i64, tpu.core_type = #tpu.core_type<tc>, window_params = [{transform_indices = @transform_0, window_bounds = array<i64: 98>}, {transform_indices = @transform_1, window_bounds = array<i64: 1>}, {pipeline_mode = #tpu.pipeline_mode<synchronous>, transform_indices = @transform_2, window_bounds = array<i64: 7, 256>}, {pipeline_mode = #tpu.pipeline_mode<synchronous>, transform_indices = @transform_3, window_bounds = array<i64: 7, 256>}, {transform_indices = @transform_4, window_bounds = array<i64: 1, 4, 256>}, {transform_indices = @transform_5, window_bounds = array<i64: 1, 4, 256>}]} {
    %c0 = arith.constant 0 : index
    %c0_0 = arith.constant 0 : index
    %c0_1 = arith.constant 0 : index
    %0 = vector.load %arg5[%c0, %c0_0, %c0_1] : memref<1x4x256xf32, #tpu.memory_space<vmem>>, vector<1x4x256xf32>
    %cst = arith.constant dense<0.000000e+00> : vector<1x256xf32>
    %1 = vector.multi_reduction <add>, %0, %cst [1] : vector<1x4x256xf32> to vector<1x256xf32>
    %cst_2 = arith.constant dense<0xFF800000> : vector<1x256xf32>
    %2 = vector.multi_reduction <maximumf>, %0, %cst_2 [1] : vector<1x4x256xf32> to vector<1x256xf32>
    %cst_3 = arith.constant 2.500000e-01 : f32
    %3 = vector.broadcast %cst_3 : f32 to vector<1x256xf32>
    %4 = arith.mulf %1, %3 : vector<1x256xf32>
    %c0_4 = arith.constant 0 : index
    %c0_5 = arith.constant 0 : index
    %5 = vector.load %arg3[%c0_4, %c0_5] : memref<7x256xf32, #tpu.memory_space<vmem>>, vector<1x256xf32>
    %c48_i32 = arith.constant 48 : i32
    %6 = tpu.dynamic_rotate %4 by %c48_i32 dim 1 : vector<1x256xf32>, i32 -> vector<1x256xf32>
    %7 = arith.mulf %5, %6 : vector<1x256xf32>
    %c48_i32_6 = arith.constant 48 : i32
    %8 = tpu.dynamic_rotate %2 by %c48_i32_6 dim 1 : vector<1x256xf32>, i32 -> vector<1x256xf32>
    %9 = arith.mulf %5, %8 : vector<1x256xf32>
    %c0_7 = arith.constant 0 : index
    %10 = memref.load %arg1[%c0_7] : memref<98xf32, #tpu.memory_space<smem>>
    %11 = vector.broadcast %10 : f32 to vector<1x256xf32>
    %12 = arith.mulf %11, %7 : vector<1x256xf32>
    %c49 = arith.constant 49 : index
    %13 = memref.load %arg1[%c49] : memref<98xf32, #tpu.memory_space<smem>>
    %14 = vector.broadcast %13 : f32 to vector<1x256xf32>
    %15 = arith.mulf %14, %9 : vector<1x256xf32>
    %16 = arith.addf %12, %15 : vector<1x256xf32>
    %c1 = arith.constant 1 : index
    %17 = memref.load %arg1[%c1] : memref<98xf32, #tpu.memory_space<smem>>
    %18 = vector.broadcast %17 : f32 to vector<1x256xf32>
    %19 = arith.mulf %18, %7 : vector<1x256xf32>
    %c50 = arith.constant 50 : index
    %20 = memref.load %arg1[%c50] : memref<98xf32, #tpu.memory_space<smem>>
    %21 = vector.broadcast %20 : f32 to vector<1x256xf32>
    %22 = arith.mulf %21, %9 : vector<1x256xf32>
    %23 = arith.addf %19, %22 : vector<1x256xf32>
    %c2 = arith.constant 2 : index
    %24 = memref.load %arg1[%c2] : memref<98xf32, #tpu.memory_space<smem>>
    %25 = vector.broadcast %24 : f32 to vector<1x256xf32>
    %26 = arith.mulf %25, %7 : vector<1x256xf32>
    %c51 = arith.constant 51 : index
    %27 = memref.load %arg1[%c51] : memref<98xf32, #tpu.memory_space<smem>>
    %28 = vector.broadcast %27 : f32 to vector<1x256xf32>
    %29 = arith.mulf %28, %9 : vector<1x256xf32>
    %30 = arith.addf %26, %29 : vector<1x256xf32>
    %c3 = arith.constant 3 : index
    %31 = memref.load %arg1[%c3] : memref<98xf32, #tpu.memory_space<smem>>
    %32 = vector.broadcast %31 : f32 to vector<1x256xf32>
    %33 = arith.mulf %32, %7 : vector<1x256xf32>
    %c52 = arith.constant 52 : index
    %34 = memref.load %arg1[%c52] : memref<98xf32, #tpu.memory_space<smem>>
    %35 = vector.broadcast %34 : f32 to vector<1x256xf32>
    %36 = arith.mulf %35, %9 : vector<1x256xf32>
    %37 = arith.addf %33, %36 : vector<1x256xf32>
    %c4 = arith.constant 4 : index
    %38 = memref.load %arg1[%c4] : memref<98xf32, #tpu.memory_space<smem>>
    %39 = vector.broadcast %38 : f32 to vector<1x256xf32>
    %40 = arith.mulf %39, %7 : vector<1x256xf32>
    %c53 = arith.constant 53 : index
    %41 = memref.load %arg1[%c53] : memref<98xf32, #tpu.memory_space<smem>>
    %42 = vector.broadcast %41 : f32 to vector<1x256xf32>
    %43 = arith.mulf %42, %9 : vector<1x256xf32>
    %44 = arith.addf %40, %43 : vector<1x256xf32>
    %c5 = arith.constant 5 : index
    %45 = memref.load %arg1[%c5] : memref<98xf32, #tpu.memory_space<smem>>
    %46 = vector.broadcast %45 : f32 to vector<1x256xf32>
    %47 = arith.mulf %46, %7 : vector<1x256xf32>
    %c54 = arith.constant 54 : index
    %48 = memref.load %arg1[%c54] : memref<98xf32, #tpu.memory_space<smem>>
    %49 = vector.broadcast %48 : f32 to vector<1x256xf32>
    %50 = arith.mulf %49, %9 : vector<1x256xf32>
    %51 = arith.addf %47, %50 : vector<1x256xf32>
    %c6 = arith.constant 6 : index
    %52 = memref.load %arg1[%c6] : memref<98xf32, #tpu.memory_space<smem>>
    %53 = vector.broadcast %52 : f32 to vector<1x256xf32>
    %54 = arith.mulf %53, %7 : vector<1x256xf32>
    %c55 = arith.constant 55 : index
    %55 = memref.load %arg1[%c55] : memref<98xf32, #tpu.memory_space<smem>>
    %56 = vector.broadcast %55 : f32 to vector<1x256xf32>
    %57 = arith.mulf %56, %9 : vector<1x256xf32>
    %58 = arith.addf %54, %57 : vector<1x256xf32>
    %c1_8 = arith.constant 1 : index
    %c0_9 = arith.constant 0 : index
    %59 = vector.load %arg3[%c1_8, %c0_9] : memref<7x256xf32, #tpu.memory_space<vmem>>, vector<1x256xf32>
    %c32_i32 = arith.constant 32 : i32
    %60 = tpu.dynamic_rotate %4 by %c32_i32 dim 1 : vector<1x256xf32>, i32 -> vector<1x256xf32>
    %61 = arith.mulf %59, %60 : vector<1x256xf32>
    %c32_i32_10 = arith.constant 32 : i32
    %62 = tpu.dynamic_rotate %2 by %c32_i32_10 dim 1 : vector<1x256xf32>, i32 -> vector<1x256xf32>
    %63 = arith.mulf %59, %62 : vector<1x256xf32>
    %c7 = arith.constant 7 : index
    %64 = memref.load %arg1[%c7] : memref<98xf32, #tpu.memory_space<smem>>
    %65 = vector.broadcast %64 : f32 to vector<1x256xf32>
    %66 = arith.mulf %65, %61 : vector<1x256xf32>
    %c56 = arith.constant 56 : index
    %67 = memref.load %arg1[%c56] : memref<98xf32, #tpu.memory_space<smem>>
    %68 = vector.broadcast %67 : f32 to vector<1x256xf32>
    %69 = arith.mulf %68, %63 : vector<1x256xf32>
    %70 = arith.addf %66, %69 : vector<1x256xf32>
    %71 = arith.addf %16, %70 : vector<1x256xf32>
    %c8 = arith.constant 8 : index
    %72 = memref.load %arg1[%c8] : memref<98xf32, #tpu.memory_space<smem>>
    %73 = vector.broadcast %72 : f32 to vector<1x256xf32>
    %74 = arith.mulf %73, %61 : vector<1x256xf32>
    %c57 = arith.constant 57 : index
    %75 = memref.load %arg1[%c57] : memref<98xf32, #tpu.memory_space<smem>>
    %76 = vector.broadcast %75 : f32 to vector<1x256xf32>
    %77 = arith.mulf %76, %63 : vector<1x256xf32>
    %78 = arith.addf %74, %77 : vector<1x256xf32>
    %79 = arith.addf %23, %78 : vector<1x256xf32>
    %c9 = arith.constant 9 : index
    %80 = memref.load %arg1[%c9] : memref<98xf32, #tpu.memory_space<smem>>
    %81 = vector.broadcast %80 : f32 to vector<1x256xf32>
    %82 = arith.mulf %81, %61 : vector<1x256xf32>
    %c58 = arith.constant 58 : index
    %83 = memref.load %arg1[%c58] : memref<98xf32, #tpu.memory_space<smem>>
    %84 = vector.broadcast %83 : f32 to vector<1x256xf32>
    %85 = arith.mulf %84, %63 : vector<1x256xf32>
    %86 = arith.addf %82, %85 : vector<1x256xf32>
    %87 = arith.addf %30, %86 : vector<1x256xf32>
    %c10 = arith.constant 10 : index
    %88 = memref.load %arg1[%c10] : memref<98xf32, #tpu.memory_space<smem>>
    %89 = vector.broadcast %88 : f32 to vector<1x256xf32>
    %90 = arith.mulf %89, %61 : vector<1x256xf32>
    %c59 = arith.constant 59 : index
    %91 = memref.load %arg1[%c59] : memref<98xf32, #tpu.memory_space<smem>>
    %92 = vector.broadcast %91 : f32 to vector<1x256xf32>
    %93 = arith.mulf %92, %63 : vector<1x256xf32>
    %94 = arith.addf %90, %93 : vector<1x256xf32>
    %95 = arith.addf %37, %94 : vector<1x256xf32>
    %c11 = arith.constant 11 : index
    %96 = memref.load %arg1[%c11] : memref<98xf32, #tpu.memory_space<smem>>
    %97 = vector.broadcast %96 : f32 to vector<1x256xf32>
    %98 = arith.mulf %97, %61 : vector<1x256xf32>
    %c60 = arith.constant 60 : index
    %99 = memref.load %arg1[%c60] : memref<98xf32, #tpu.memory_space<smem>>
    %100 = vector.broadcast %99 : f32 to vector<1x256xf32>
    %101 = arith.mulf %100, %63 : vector<1x256xf32>
    %102 = arith.addf %98, %101 : vector<1x256xf32>
    %103 = arith.addf %44, %102 : vector<1x256xf32>
    %c12 = arith.constant 12 : index
    %104 = memref.load %arg1[%c12] : memref<98xf32, #tpu.memory_space<smem>>
    %105 = vector.broadcast %104 : f32 to vector<1x256xf32>
    %106 = arith.mulf %105, %61 : vector<1x256xf32>
    %c61 = arith.constant 61 : index
    %107 = memref.load %arg1[%c61] : memref<98xf32, #tpu.memory_space<smem>>
    %108 = vector.broadcast %107 : f32 to vector<1x256xf32>
    %109 = arith.mulf %108, %63 : vector<1x256xf32>
    %110 = arith.addf %106, %109 : vector<1x256xf32>
    %111 = arith.addf %51, %110 : vector<1x256xf32>
    %c13 = arith.constant 13 : index
    %112 = memref.load %arg1[%c13] : memref<98xf32, #tpu.memory_space<smem>>
    %113 = vector.broadcast %112 : f32 to vector<1x256xf32>
    %114 = arith.mulf %113, %61 : vector<1x256xf32>
    %c62 = arith.constant 62 : index
    %115 = memref.load %arg1[%c62] : memref<98xf32, #tpu.memory_space<smem>>
    %116 = vector.broadcast %115 : f32 to vector<1x256xf32>
    %117 = arith.mulf %116, %63 : vector<1x256xf32>
    %118 = arith.addf %114, %117 : vector<1x256xf32>
    %119 = arith.addf %58, %118 : vector<1x256xf32>
    %c2_11 = arith.constant 2 : index
    %c0_12 = arith.constant 0 : index
    %120 = vector.load %arg3[%c2_11, %c0_12] : memref<7x256xf32, #tpu.memory_space<vmem>>, vector<1x256xf32>
    %c16_i32 = arith.constant 16 : i32
    %121 = tpu.dynamic_rotate %4 by %c16_i32 dim 1 : vector<1x256xf32>, i32 -> vector<1x256xf32>
    %122 = arith.mulf %120, %121 : vector<1x256xf32>
    %c16_i32_13 = arith.constant 16 : i32
    %123 = tpu.dynamic_rotate %2 by %c16_i32_13 dim 1 : vector<1x256xf32>, i32 -> vector<1x256xf32>
    %124 = arith.mulf %120, %123 : vector<1x256xf32>
    %c14 = arith.constant 14 : index
    %125 = memref.load %arg1[%c14] : memref<98xf32, #tpu.memory_space<smem>>
    %126 = vector.broadcast %125 : f32 to vector<1x256xf32>
    %127 = arith.mulf %126, %122 : vector<1x256xf32>
    %c63 = arith.constant 63 : index
    %128 = memref.load %arg1[%c63] : memref<98xf32, #tpu.memory_space<smem>>
    %129 = vector.broadcast %128 : f32 to vector<1x256xf32>
    %130 = arith.mulf %129, %124 : vector<1x256xf32>
    %131 = arith.addf %127, %130 : vector<1x256xf32>
    %132 = arith.addf %71, %131 : vector<1x256xf32>
    %c15 = arith.constant 15 : index
    %133 = memref.load %arg1[%c15] : memref<98xf32, #tpu.memory_space<smem>>
    %134 = vector.broadcast %133 : f32 to vector<1x256xf32>
    %135 = arith.mulf %134, %122 : vector<1x256xf32>
    %c64 = arith.constant 64 : index
    %136 = memref.load %arg1[%c64] : memref<98xf32, #tpu.memory_space<smem>>
    %137 = vector.broadcast %136 : f32 to vector<1x256xf32>
    %138 = arith.mulf %137, %124 : vector<1x256xf32>
    %139 = arith.addf %135, %138 : vector<1x256xf32>
    %140 = arith.addf %79, %139 : vector<1x256xf32>
    %c16 = arith.constant 16 : index
    %141 = memref.load %arg1[%c16] : memref<98xf32, #tpu.memory_space<smem>>
    %142 = vector.broadcast %141 : f32 to vector<1x256xf32>
    %143 = arith.mulf %142, %122 : vector<1x256xf32>
    %c65 = arith.constant 65 : index
    %144 = memref.load %arg1[%c65] : memref<98xf32, #tpu.memory_space<smem>>
    %145 = vector.broadcast %144 : f32 to vector<1x256xf32>
    %146 = arith.mulf %145, %124 : vector<1x256xf32>
    %147 = arith.addf %143, %146 : vector<1x256xf32>
    %148 = arith.addf %87, %147 : vector<1x256xf32>
    %c17 = arith.constant 17 : index
    %149 = memref.load %arg1[%c17] : memref<98xf32, #tpu.memory_space<smem>>
    %150 = vector.broadcast %149 : f32 to vector<1x256xf32>
    %151 = arith.mulf %150, %122 : vector<1x256xf32>
    %c66 = arith.constant 66 : index
    %152 = memref.load %arg1[%c66] : memref<98xf32, #tpu.memory_space<smem>>
    %153 = vector.broadcast %152 : f32 to vector<1x256xf32>
    %154 = arith.mulf %153, %124 : vector<1x256xf32>
    %155 = arith.addf %151, %154 : vector<1x256xf32>
    %156 = arith.addf %95, %155 : vector<1x256xf32>
    %c18 = arith.constant 18 : index
    %157 = memref.load %arg1[%c18] : memref<98xf32, #tpu.memory_space<smem>>
    %158 = vector.broadcast %157 : f32 to vector<1x256xf32>
    %159 = arith.mulf %158, %122 : vector<1x256xf32>
    %c67 = arith.constant 67 : index
    %160 = memref.load %arg1[%c67] : memref<98xf32, #tpu.memory_space<smem>>
    %161 = vector.broadcast %160 : f32 to vector<1x256xf32>
    %162 = arith.mulf %161, %124 : vector<1x256xf32>
    %163 = arith.addf %159, %162 : vector<1x256xf32>
    %164 = arith.addf %103, %163 : vector<1x256xf32>
    %c19 = arith.constant 19 : index
    %165 = memref.load %arg1[%c19] : memref<98xf32, #tpu.memory_space<smem>>
    %166 = vector.broadcast %165 : f32 to vector<1x256xf32>
    %167 = arith.mulf %166, %122 : vector<1x256xf32>
    %c68 = arith.constant 68 : index
    %168 = memref.load %arg1[%c68] : memref<98xf32, #tpu.memory_space<smem>>
    %169 = vector.broadcast %168 : f32 to vector<1x256xf32>
    %170 = arith.mulf %169, %124 : vector<1x256xf32>
    %171 = arith.addf %167, %170 : vector<1x256xf32>
    %172 = arith.addf %111, %171 : vector<1x256xf32>
    %c20 = arith.constant 20 : index
    %173 = memref.load %arg1[%c20] : memref<98xf32, #tpu.memory_space<smem>>
    %174 = vector.broadcast %173 : f32 to vector<1x256xf32>
    %175 = arith.mulf %174, %122 : vector<1x256xf32>
    %c69 = arith.constant 69 : index
    %176 = memref.load %arg1[%c69] : memref<98xf32, #tpu.memory_space<smem>>
    %177 = vector.broadcast %176 : f32 to vector<1x256xf32>
    %178 = arith.mulf %177, %124 : vector<1x256xf32>
    %179 = arith.addf %175, %178 : vector<1x256xf32>
    %180 = arith.addf %119, %179 : vector<1x256xf32>
    %c3_14 = arith.constant 3 : index
    %c0_15 = arith.constant 0 : index
    %181 = vector.load %arg3[%c3_14, %c0_15] : memref<7x256xf32, #tpu.memory_space<vmem>>, vector<1x256xf32>
    %182 = arith.mulf %181, %4 : vector<1x256xf32>
    %183 = arith.mulf %181, %2 : vector<1x256xf32>
    %c21 = arith.constant 21 : index
    %184 = memref.load %arg1[%c21] : memref<98xf32, #tpu.memory_space<smem>>
    %185 = vector.broadcast %184 : f32 to vector<1x256xf32>
    %186 = arith.mulf %185, %182 : vector<1x256xf32>
    %c70 = arith.constant 70 : index
    %187 = memref.load %arg1[%c70] : memref<98xf32, #tpu.memory_space<smem>>
    %188 = vector.broadcast %187 : f32 to vector<1x256xf32>
    %189 = arith.mulf %188, %183 : vector<1x256xf32>
    %190 = arith.addf %186, %189 : vector<1x256xf32>
    %191 = arith.addf %132, %190 : vector<1x256xf32>
    %c22 = arith.constant 22 : index
    %192 = memref.load %arg1[%c22] : memref<98xf32, #tpu.memory_space<smem>>
    %193 = vector.broadcast %192 : f32 to vector<1x256xf32>
    %194 = arith.mulf %193, %182 : vector<1x256xf32>
    %c71 = arith.constant 71 : index
    %195 = memref.load %arg1[%c71] : memref<98xf32, #tpu.memory_space<smem>>
    %196 = vector.broadcast %195 : f32 to vector<1x256xf32>
    %197 = arith.mulf %196, %183 : vector<1x256xf32>
    %198 = arith.addf %194, %197 : vector<1x256xf32>
    %199 = arith.addf %140, %198 : vector<1x256xf32>
    %c23 = arith.constant 23 : index
    %200 = memref.load %arg1[%c23] : memref<98xf32, #tpu.memory_space<smem>>
    %201 = vector.broadcast %200 : f32 to vector<1x256xf32>
    %202 = arith.mulf %201, %182 : vector<1x256xf32>
    %c72 = arith.constant 72 : index
    %203 = memref.load %arg1[%c72] : memref<98xf32, #tpu.memory_space<smem>>
    %204 = vector.broadcast %203 : f32 to vector<1x256xf32>
    %205 = arith.mulf %204, %183 : vector<1x256xf32>
    %206 = arith.addf %202, %205 : vector<1x256xf32>
    %207 = arith.addf %148, %206 : vector<1x256xf32>
    %c24 = arith.constant 24 : index
    %208 = memref.load %arg1[%c24] : memref<98xf32, #tpu.memory_space<smem>>
    %209 = vector.broadcast %208 : f32 to vector<1x256xf32>
    %210 = arith.mulf %209, %182 : vector<1x256xf32>
    %c73 = arith.constant 73 : index
    %211 = memref.load %arg1[%c73] : memref<98xf32, #tpu.memory_space<smem>>
    %212 = vector.broadcast %211 : f32 to vector<1x256xf32>
    %213 = arith.mulf %212, %183 : vector<1x256xf32>
    %214 = arith.addf %210, %213 : vector<1x256xf32>
    %215 = arith.addf %156, %214 : vector<1x256xf32>
    %c25 = arith.constant 25 : index
    %216 = memref.load %arg1[%c25] : memref<98xf32, #tpu.memory_space<smem>>
    %217 = vector.broadcast %216 : f32 to vector<1x256xf32>
    %218 = arith.mulf %217, %182 : vector<1x256xf32>
    %c74 = arith.constant 74 : index
    %219 = memref.load %arg1[%c74] : memref<98xf32, #tpu.memory_space<smem>>
    %220 = vector.broadcast %219 : f32 to vector<1x256xf32>
    %221 = arith.mulf %220, %183 : vector<1x256xf32>
    %222 = arith.addf %218, %221 : vector<1x256xf32>
    %223 = arith.addf %164, %222 : vector<1x256xf32>
    %c26 = arith.constant 26 : index
    %224 = memref.load %arg1[%c26] : memref<98xf32, #tpu.memory_space<smem>>
    %225 = vector.broadcast %224 : f32 to vector<1x256xf32>
    %226 = arith.mulf %225, %182 : vector<1x256xf32>
    %c75 = arith.constant 75 : index
    %227 = memref.load %arg1[%c75] : memref<98xf32, #tpu.memory_space<smem>>
    %228 = vector.broadcast %227 : f32 to vector<1x256xf32>
    %229 = arith.mulf %228, %183 : vector<1x256xf32>
    %230 = arith.addf %226, %229 : vector<1x256xf32>
    %231 = arith.addf %172, %230 : vector<1x256xf32>
    %c27 = arith.constant 27 : index
    %232 = memref.load %arg1[%c27] : memref<98xf32, #tpu.memory_space<smem>>
    %233 = vector.broadcast %232 : f32 to vector<1x256xf32>
    %234 = arith.mulf %233, %182 : vector<1x256xf32>
    %c76 = arith.constant 76 : index
    %235 = memref.load %arg1[%c76] : memref<98xf32, #tpu.memory_space<smem>>
    %236 = vector.broadcast %235 : f32 to vector<1x256xf32>
    %237 = arith.mulf %236, %183 : vector<1x256xf32>
    %238 = arith.addf %234, %237 : vector<1x256xf32>
    %239 = arith.addf %180, %238 : vector<1x256xf32>
    %c4_16 = arith.constant 4 : index
    %c0_17 = arith.constant 0 : index
    %240 = vector.load %arg3[%c4_16, %c0_17] : memref<7x256xf32, #tpu.memory_space<vmem>>, vector<1x256xf32>
    %c240_i32 = arith.constant 240 : i32
    %241 = tpu.dynamic_rotate %4 by %c240_i32 dim 1 : vector<1x256xf32>, i32 -> vector<1x256xf32>
    %242 = arith.mulf %240, %241 : vector<1x256xf32>
    %c240_i32_18 = arith.constant 240 : i32
    %243 = tpu.dynamic_rotate %2 by %c240_i32_18 dim 1 : vector<1x256xf32>, i32 -> vector<1x256xf32>
    %244 = arith.mulf %240, %243 : vector<1x256xf32>
    %c28 = arith.constant 28 : index
    %245 = memref.load %arg1[%c28] : memref<98xf32, #tpu.memory_space<smem>>
    %246 = vector.broadcast %245 : f32 to vector<1x256xf32>
    %247 = arith.mulf %246, %242 : vector<1x256xf32>
    %c77 = arith.constant 77 : index
    %248 = memref.load %arg1[%c77] : memref<98xf32, #tpu.memory_space<smem>>
    %249 = vector.broadcast %248 : f32 to vector<1x256xf32>
    %250 = arith.mulf %249, %244 : vector<1x256xf32>
    %251 = arith.addf %247, %250 : vector<1x256xf32>
    %252 = arith.addf %191, %251 : vector<1x256xf32>
    %c29 = arith.constant 29 : index
    %253 = memref.load %arg1[%c29] : memref<98xf32, #tpu.memory_space<smem>>
    %254 = vector.broadcast %253 : f32 to vector<1x256xf32>
    %255 = arith.mulf %254, %242 : vector<1x256xf32>
    %c78 = arith.constant 78 : index
    %256 = memref.load %arg1[%c78] : memref<98xf32, #tpu.memory_space<smem>>
    %257 = vector.broadcast %256 : f32 to vector<1x256xf32>
    %258 = arith.mulf %257, %244 : vector<1x256xf32>
    %259 = arith.addf %255, %258 : vector<1x256xf32>
    %260 = arith.addf %199, %259 : vector<1x256xf32>
    %c30 = arith.constant 30 : index
    %261 = memref.load %arg1[%c30] : memref<98xf32, #tpu.memory_space<smem>>
    %262 = vector.broadcast %261 : f32 to vector<1x256xf32>
    %263 = arith.mulf %262, %242 : vector<1x256xf32>
    %c79 = arith.constant 79 : index
    %264 = memref.load %arg1[%c79] : memref<98xf32, #tpu.memory_space<smem>>
    %265 = vector.broadcast %264 : f32 to vector<1x256xf32>
    %266 = arith.mulf %265, %244 : vector<1x256xf32>
    %267 = arith.addf %263, %266 : vector<1x256xf32>
    %268 = arith.addf %207, %267 : vector<1x256xf32>
    %c31 = arith.constant 31 : index
    %269 = memref.load %arg1[%c31] : memref<98xf32, #tpu.memory_space<smem>>
    %270 = vector.broadcast %269 : f32 to vector<1x256xf32>
    %271 = arith.mulf %270, %242 : vector<1x256xf32>
    %c80 = arith.constant 80 : index
    %272 = memref.load %arg1[%c80] : memref<98xf32, #tpu.memory_space<smem>>
    %273 = vector.broadcast %272 : f32 to vector<1x256xf32>
    %274 = arith.mulf %273, %244 : vector<1x256xf32>
    %275 = arith.addf %271, %274 : vector<1x256xf32>
    %276 = arith.addf %215, %275 : vector<1x256xf32>
    %c32 = arith.constant 32 : index
    %277 = memref.load %arg1[%c32] : memref<98xf32, #tpu.memory_space<smem>>
    %278 = vector.broadcast %277 : f32 to vector<1x256xf32>
    %279 = arith.mulf %278, %242 : vector<1x256xf32>
    %c81 = arith.constant 81 : index
    %280 = memref.load %arg1[%c81] : memref<98xf32, #tpu.memory_space<smem>>
    %281 = vector.broadcast %280 : f32 to vector<1x256xf32>
    %282 = arith.mulf %281, %244 : vector<1x256xf32>
    %283 = arith.addf %279, %282 : vector<1x256xf32>
    %284 = arith.addf %223, %283 : vector<1x256xf32>
    %c33 = arith.constant 33 : index
    %285 = memref.load %arg1[%c33] : memref<98xf32, #tpu.memory_space<smem>>
    %286 = vector.broadcast %285 : f32 to vector<1x256xf32>
    %287 = arith.mulf %286, %242 : vector<1x256xf32>
    %c82 = arith.constant 82 : index
    %288 = memref.load %arg1[%c82] : memref<98xf32, #tpu.memory_space<smem>>
    %289 = vector.broadcast %288 : f32 to vector<1x256xf32>
    %290 = arith.mulf %289, %244 : vector<1x256xf32>
    %291 = arith.addf %287, %290 : vector<1x256xf32>
    %292 = arith.addf %231, %291 : vector<1x256xf32>
    %c34 = arith.constant 34 : index
    %293 = memref.load %arg1[%c34] : memref<98xf32, #tpu.memory_space<smem>>
    %294 = vector.broadcast %293 : f32 to vector<1x256xf32>
    %295 = arith.mulf %294, %242 : vector<1x256xf32>
    %c83 = arith.constant 83 : index
    %296 = memref.load %arg1[%c83] : memref<98xf32, #tpu.memory_space<smem>>
    %297 = vector.broadcast %296 : f32 to vector<1x256xf32>
    %298 = arith.mulf %297, %244 : vector<1x256xf32>
    %299 = arith.addf %295, %298 : vector<1x256xf32>
    %300 = arith.addf %239, %299 : vector<1x256xf32>
    %c5_19 = arith.constant 5 : index
    %c0_20 = arith.constant 0 : index
    %301 = vector.load %arg3[%c5_19, %c0_20] : memref<7x256xf32, #tpu.memory_space<vmem>>, vector<1x256xf32>
    %c224_i32 = arith.constant 224 : i32
    %302 = tpu.dynamic_rotate %4 by %c224_i32 dim 1 : vector<1x256xf32>, i32 -> vector<1x256xf32>
    %303 = arith.mulf %301, %302 : vector<1x256xf32>
    %c224_i32_21 = arith.constant 224 : i32
    %304 = tpu.dynamic_rotate %2 by %c224_i32_21 dim 1 : vector<1x256xf32>, i32 -> vector<1x256xf32>
    %305 = arith.mulf %301, %304 : vector<1x256xf32>
    %c35 = arith.constant 35 : index
    %306 = memref.load %arg1[%c35] : memref<98xf32, #tpu.memory_space<smem>>
    %307 = vector.broadcast %306 : f32 to vector<1x256xf32>
    %308 = arith.mulf %307, %303 : vector<1x256xf32>
    %c84 = arith.constant 84 : index
    %309 = memref.load %arg1[%c84] : memref<98xf32, #tpu.memory_space<smem>>
    %310 = vector.broadcast %309 : f32 to vector<1x256xf32>
    %311 = arith.mulf %310, %305 : vector<1x256xf32>
    %312 = arith.addf %308, %311 : vector<1x256xf32>
    %313 = arith.addf %252, %312 : vector<1x256xf32>
    %c36 = arith.constant 36 : index
    %314 = memref.load %arg1[%c36] : memref<98xf32, #tpu.memory_space<smem>>
    %315 = vector.broadcast %314 : f32 to vector<1x256xf32>
    %316 = arith.mulf %315, %303 : vector<1x256xf32>
    %c85 = arith.constant 85 : index
    %317 = memref.load %arg1[%c85] : memref<98xf32, #tpu.memory_space<smem>>
    %318 = vector.broadcast %317 : f32 to vector<1x256xf32>
    %319 = arith.mulf %318, %305 : vector<1x256xf32>
    %320 = arith.addf %316, %319 : vector<1x256xf32>
    %321 = arith.addf %260, %320 : vector<1x256xf32>
    %c37 = arith.constant 37 : index
    %322 = memref.load %arg1[%c37] : memref<98xf32, #tpu.memory_space<smem>>
    %323 = vector.broadcast %322 : f32 to vector<1x256xf32>
    %324 = arith.mulf %323, %303 : vector<1x256xf32>
    %c86 = arith.constant 86 : index
    %325 = memref.load %arg1[%c86] : memref<98xf32, #tpu.memory_space<smem>>
    %326 = vector.broadcast %325 : f32 to vector<1x256xf32>
    %327 = arith.mulf %326, %305 : vector<1x256xf32>
    %328 = arith.addf %324, %327 : vector<1x256xf32>
    %329 = arith.addf %268, %328 : vector<1x256xf32>
    %c38 = arith.constant 38 : index
    %330 = memref.load %arg1[%c38] : memref<98xf32, #tpu.memory_space<smem>>
    %331 = vector.broadcast %330 : f32 to vector<1x256xf32>
    %332 = arith.mulf %331, %303 : vector<1x256xf32>
    %c87 = arith.constant 87 : index
    %333 = memref.load %arg1[%c87] : memref<98xf32, #tpu.memory_space<smem>>
    %334 = vector.broadcast %333 : f32 to vector<1x256xf32>
    %335 = arith.mulf %334, %305 : vector<1x256xf32>
    %336 = arith.addf %332, %335 : vector<1x256xf32>
    %337 = arith.addf %276, %336 : vector<1x256xf32>
    %c39 = arith.constant 39 : index
    %338 = memref.load %arg1[%c39] : memref<98xf32, #tpu.memory_space<smem>>
    %339 = vector.broadcast %338 : f32 to vector<1x256xf32>
    %340 = arith.mulf %339, %303 : vector<1x256xf32>
    %c88 = arith.constant 88 : index
    %341 = memref.load %arg1[%c88] : memref<98xf32, #tpu.memory_space<smem>>
    %342 = vector.broadcast %341 : f32 to vector<1x256xf32>
    %343 = arith.mulf %342, %305 : vector<1x256xf32>
    %344 = arith.addf %340, %343 : vector<1x256xf32>
    %345 = arith.addf %284, %344 : vector<1x256xf32>
    %c40 = arith.constant 40 : index
    %346 = memref.load %arg1[%c40] : memref<98xf32, #tpu.memory_space<smem>>
    %347 = vector.broadcast %346 : f32 to vector<1x256xf32>
    %348 = arith.mulf %347, %303 : vector<1x256xf32>
    %c89 = arith.constant 89 : index
    %349 = memref.load %arg1[%c89] : memref<98xf32, #tpu.memory_space<smem>>
    %350 = vector.broadcast %349 : f32 to vector<1x256xf32>
    %351 = arith.mulf %350, %305 : vector<1x256xf32>
    %352 = arith.addf %348, %351 : vector<1x256xf32>
    %353 = arith.addf %292, %352 : vector<1x256xf32>
    %c41 = arith.constant 41 : index
    %354 = memref.load %arg1[%c41] : memref<98xf32, #tpu.memory_space<smem>>
    %355 = vector.broadcast %354 : f32 to vector<1x256xf32>
    %356 = arith.mulf %355, %303 : vector<1x256xf32>
    %c90 = arith.constant 90 : index
    %357 = memref.load %arg1[%c90] : memref<98xf32, #tpu.memory_space<smem>>
    %358 = vector.broadcast %357 : f32 to vector<1x256xf32>
    %359 = arith.mulf %358, %305 : vector<1x256xf32>
    %360 = arith.addf %356, %359 : vector<1x256xf32>
    %361 = arith.addf %300, %360 : vector<1x256xf32>
    %c6_22 = arith.constant 6 : index
    %c0_23 = arith.constant 0 : index
    %362 = vector.load %arg3[%c6_22, %c0_23] : memref<7x256xf32, #tpu.memory_space<vmem>>, vector<1x256xf32>
    %c208_i32 = arith.constant 208 : i32
    %363 = tpu.dynamic_rotate %4 by %c208_i32 dim 1 : vector<1x256xf32>, i32 -> vector<1x256xf32>
    %364 = arith.mulf %362, %363 : vector<1x256xf32>
    %c208_i32_24 = arith.constant 208 : i32
    %365 = tpu.dynamic_rotate %2 by %c208_i32_24 dim 1 : vector<1x256xf32>, i32 -> vector<1x256xf32>
    %366 = arith.mulf %362, %365 : vector<1x256xf32>
    %c42 = arith.constant 42 : index
    %367 = memref.load %arg1[%c42] : memref<98xf32, #tpu.memory_space<smem>>
    %368 = vector.broadcast %367 : f32 to vector<1x256xf32>
    %369 = arith.mulf %368, %364 : vector<1x256xf32>
    %c91 = arith.constant 91 : index
    %370 = memref.load %arg1[%c91] : memref<98xf32, #tpu.memory_space<smem>>
    %371 = vector.broadcast %370 : f32 to vector<1x256xf32>
    %372 = arith.mulf %371, %366 : vector<1x256xf32>
    %373 = arith.addf %369, %372 : vector<1x256xf32>
    %374 = arith.addf %313, %373 : vector<1x256xf32>
    %c43 = arith.constant 43 : index
    %375 = memref.load %arg1[%c43] : memref<98xf32, #tpu.memory_space<smem>>
    %376 = vector.broadcast %375 : f32 to vector<1x256xf32>
    %377 = arith.mulf %376, %364 : vector<1x256xf32>
    %c92 = arith.constant 92 : index
    %378 = memref.load %arg1[%c92] : memref<98xf32, #tpu.memory_space<smem>>
    %379 = vector.broadcast %378 : f32 to vector<1x256xf32>
    %380 = arith.mulf %379, %366 : vector<1x256xf32>
    %381 = arith.addf %377, %380 : vector<1x256xf32>
    %382 = arith.addf %321, %381 : vector<1x256xf32>
    %c44 = arith.constant 44 : index
    %383 = memref.load %arg1[%c44] : memref<98xf32, #tpu.memory_space<smem>>
    %384 = vector.broadcast %383 : f32 to vector<1x256xf32>
    %385 = arith.mulf %384, %364 : vector<1x256xf32>
    %c93 = arith.constant 93 : index
    %386 = memref.load %arg1[%c93] : memref<98xf32, #tpu.memory_space<smem>>
    %387 = vector.broadcast %386 : f32 to vector<1x256xf32>
    %388 = arith.mulf %387, %366 : vector<1x256xf32>
    %389 = arith.addf %385, %388 : vector<1x256xf32>
    %390 = arith.addf %329, %389 : vector<1x256xf32>
    %c45 = arith.constant 45 : index
    %391 = memref.load %arg1[%c45] : memref<98xf32, #tpu.memory_space<smem>>
    %392 = vector.broadcast %391 : f32 to vector<1x256xf32>
    %393 = arith.mulf %392, %364 : vector<1x256xf32>
    %c94 = arith.constant 94 : index
    %394 = memref.load %arg1[%c94] : memref<98xf32, #tpu.memory_space<smem>>
    %395 = vector.broadcast %394 : f32 to vector<1x256xf32>
    %396 = arith.mulf %395, %366 : vector<1x256xf32>
    %397 = arith.addf %393, %396 : vector<1x256xf32>
    %398 = arith.addf %337, %397 : vector<1x256xf32>
    %c46 = arith.constant 46 : index
    %399 = memref.load %arg1[%c46] : memref<98xf32, #tpu.memory_space<smem>>
    %400 = vector.broadcast %399 : f32 to vector<1x256xf32>
    %401 = arith.mulf %400, %364 : vector<1x256xf32>
    %c95 = arith.constant 95 : index
    %402 = memref.load %arg1[%c95] : memref<98xf32, #tpu.memory_space<smem>>
    %403 = vector.broadcast %402 : f32 to vector<1x256xf32>
    %404 = arith.mulf %403, %366 : vector<1x256xf32>
    %405 = arith.addf %401, %404 : vector<1x256xf32>
    %406 = arith.addf %345, %405 : vector<1x256xf32>
    %c47 = arith.constant 47 : index
    %407 = memref.load %arg1[%c47] : memref<98xf32, #tpu.memory_space<smem>>
    %408 = vector.broadcast %407 : f32 to vector<1x256xf32>
    %409 = arith.mulf %408, %364 : vector<1x256xf32>
    %c96 = arith.constant 96 : index
    %410 = memref.load %arg1[%c96] : memref<98xf32, #tpu.memory_space<smem>>
    %411 = vector.broadcast %410 : f32 to vector<1x256xf32>
    %412 = arith.mulf %411, %366 : vector<1x256xf32>
    %413 = arith.addf %409, %412 : vector<1x256xf32>
    %414 = arith.addf %353, %413 : vector<1x256xf32>
    %c48 = arith.constant 48 : index
    %415 = memref.load %arg1[%c48] : memref<98xf32, #tpu.memory_space<smem>>
    %416 = vector.broadcast %415 : f32 to vector<1x256xf32>
    %417 = arith.mulf %416, %364 : vector<1x256xf32>
    %c97 = arith.constant 97 : index
    %418 = memref.load %arg1[%c97] : memref<98xf32, #tpu.memory_space<smem>>
    %419 = vector.broadcast %418 : f32 to vector<1x256xf32>
    %420 = arith.mulf %419, %366 : vector<1x256xf32>
    %421 = arith.addf %417, %420 : vector<1x256xf32>
    %422 = arith.addf %361, %421 : vector<1x256xf32>
    %c0_25 = arith.constant 0 : index
    %c0_26 = arith.constant 0 : index
    %423 = vector.load %arg4[%c0_25, %c0_26] : memref<7x256xf32, #tpu.memory_space<vmem>>, vector<1x256xf32>
    %c3_i32 = arith.constant 3 : i32
    %424 = tpu.dynamic_rotate %374 by %c3_i32 dim 1 : vector<1x256xf32>, i32 -> vector<1x256xf32>
    %425 = arith.mulf %423, %424 : vector<1x256xf32>
    %c1_27 = arith.constant 1 : index
    %c0_28 = arith.constant 0 : index
    %426 = vector.load %arg4[%c1_27, %c0_28] : memref<7x256xf32, #tpu.memory_space<vmem>>, vector<1x256xf32>
    %c2_i32 = arith.constant 2 : i32
    %427 = tpu.dynamic_rotate %382 by %c2_i32 dim 1 : vector<1x256xf32>, i32 -> vector<1x256xf32>
    %428 = arith.mulf %426, %427 : vector<1x256xf32>
    %c2_29 = arith.constant 2 : index
    %c0_30 = arith.constant 0 : index
    %429 = vector.load %arg4[%c2_29, %c0_30] : memref<7x256xf32, #tpu.memory_space<vmem>>, vector<1x256xf32>
    %c1_i32 = arith.constant 1 : i32
    %430 = tpu.dynamic_rotate %390 by %c1_i32 dim 1 : vector<1x256xf32>, i32 -> vector<1x256xf32>
    %431 = arith.mulf %429, %430 : vector<1x256xf32>
    %432 = arith.addf %425, %431 : vector<1x256xf32>
    %c3_31 = arith.constant 3 : index
    %c0_32 = arith.constant 0 : index
    %433 = vector.load %arg4[%c3_31, %c0_32] : memref<7x256xf32, #tpu.memory_space<vmem>>, vector<1x256xf32>
    %434 = arith.mulf %433, %398 : vector<1x256xf32>
    %435 = arith.addf %428, %434 : vector<1x256xf32>
    %c4_33 = arith.constant 4 : index
    %c0_34 = arith.constant 0 : index
    %436 = vector.load %arg4[%c4_33, %c0_34] : memref<7x256xf32, #tpu.memory_space<vmem>>, vector<1x256xf32>
    %c255_i32 = arith.constant 255 : i32
    %437 = tpu.dynamic_rotate %406 by %c255_i32 dim 1 : vector<1x256xf32>, i32 -> vector<1x256xf32>
    %438 = arith.mulf %436, %437 : vector<1x256xf32>
    %439 = arith.addf %432, %438 : vector<1x256xf32>
    %c5_35 = arith.constant 5 : index
    %c0_36 = arith.constant 0 : index
    %440 = vector.load %arg4[%c5_35, %c0_36] : memref<7x256xf32, #tpu.memory_space<vmem>>, vector<1x256xf32>
    %c254_i32 = arith.constant 254 : i32
    %441 = tpu.dynamic_rotate %414 by %c254_i32 dim 1 : vector<1x256xf32>, i32 -> vector<1x256xf32>
    %442 = arith.mulf %440, %441 : vector<1x256xf32>
    %443 = arith.addf %435, %442 : vector<1x256xf32>
    %c6_37 = arith.constant 6 : index
    %c0_38 = arith.constant 0 : index
    %444 = vector.load %arg4[%c6_37, %c0_38] : memref<7x256xf32, #tpu.memory_space<vmem>>, vector<1x256xf32>
    %c253_i32 = arith.constant 253 : i32
    %445 = tpu.dynamic_rotate %422 by %c253_i32 dim 1 : vector<1x256xf32>, i32 -> vector<1x256xf32>
    %446 = arith.mulf %444, %445 : vector<1x256xf32>
    %447 = arith.addf %439, %446 : vector<1x256xf32>
    %448 = arith.addf %447, %443 : vector<1x256xf32>
    %c0_39 = arith.constant 0 : index
    %449 = memref.load %arg2[%c0_39] : memref<1xf32, #tpu.memory_space<smem>>
    %450 = vector.broadcast %449 : f32 to vector<1x256xf32>
    %451 = arith.addf %448, %450 : vector<1x256xf32>
    %452 = arith.negf %451 : vector<1x256xf32>
    %453 = math.exp %452 : vector<1x256xf32>
    %cst_40 = arith.constant 1.000000e+00 : f32
    %454 = vector.broadcast %cst_40 : f32 to vector<1x256xf32>
    %455 = arith.addf %454, %453 : vector<1x256xf32>
    %456 = arith.divf %454, %455 : vector<1x256xf32>
    %457 = vector.shape_cast %456 : vector<1x256xf32> to vector<1x1x256xf32>
    %c0_41 = arith.constant 0 : index
    %c0_42 = arith.constant 0 : index
    %c0_43 = arith.constant 0 : index
    %458 = vector.load %arg5[%c0_41, %c0_42, %c0_43] : memref<1x4x256xf32, #tpu.memory_space<vmem>>, vector<1x4x256xf32>
    %459 = vector.broadcast %457 : vector<1x1x256xf32> to vector<1x4x256xf32>
    %460 = arith.mulf %458, %459 : vector<1x4x256xf32>
    %c0_44 = arith.constant 0 : index
    %c0_45 = arith.constant 0 : index
    %c0_46 = arith.constant 0 : index
    %461 = vector.load %arg6[%c0_44, %c0_45, %c0_46] : memref<1x4x256xf32, #tpu.memory_space<vmem>>, vector<1x4x256xf32>
    tpu.vector_store %arg6[%c0_44, %c0_45, %c0_46], %460 {strides = array<i32>} : memref<1x4x256xf32, #tpu.memory_space<vmem>>, vector<1x4x256xf32>,
    return
  }
  func.func @transform_0(%arg0: i32) -> i32 {
    %c0_i32 = arith.constant 0 : i32
    %c0_i32_0 = arith.constant 0 : i32
    return %c0_i32 : i32
  }
  func.func @transform_1(%arg0: i32) -> i32 {
    %c0_i32 = arith.constant 0 : i32
    %c0_i32_0 = arith.constant 0 : i32
    return %c0_i32 : i32
  }
  func.func @transform_2(%arg0: i32) -> (i32, i32) {
    %c0_i32 = arith.constant 0 : i32
    %c0_i32_0 = arith.constant 0 : i32
    %c0_i32_1 = arith.constant 0 : i32
    return %c0_i32, %c0_i32_0 : i32, i32
  }
  func.func @transform_3(%arg0: i32) -> (i32, i32) {
    %c0_i32 = arith.constant 0 : i32
    %c0_i32_0 = arith.constant 0 : i32
    %c0_i32_1 = arith.constant 0 : i32
    return %c0_i32, %c0_i32_0 : i32, i32
  }
  func.func @transform_4(%arg0: i32) -> (i32, i32, i32) {
    %c0_i32 = arith.constant 0 : i32
    %c0_i32_0 = arith.constant 0 : i32
    %c0_i32_1 = arith.constant 0 : i32
    return %arg0, %c0_i32, %c0_i32_0 : i32, i32, i32
  }
  func.func @transform_5(%arg0: i32) -> (i32, i32, i32) {
    %c0_i32 = arith.constant 0 : i32
    %c0_i32_0 = arith.constant 0 : i32
    %c0_i32_1 = arith.constant 0 : i32
    return %arg0, %c0_i32, %c0_i32_0 : i32, i32, i32
  }
}

</mosaic_0001>

<llo_original>
// kernel: tpu_custom_call.1
$region0: #{tpu_custom_call.1}
  #allocation0 [shape = 'u32[]', space=smem, size = 0x4, offset = 0x4, fixed_abs, tag = 'smem constant byte address 0x4 - core index']
  #allocation1 [shape = 'u32[144,128]{1,0:T(1,128)}', space=vmem, size = 0x12000, scoped, tag = 'internal scratch']
  %s0 = inlined_call_operand.hbm [shape: f32[8,128], index: 0, kind: input, shape index: {}]
  %s1 = inlined_call_operand.hbm [shape: f32[8,128], index: 1, kind: output, shape index: {}]
  %s2 = sld [smem:[#allocation0]]
  $region18: #{tpu_custom_call.1} parent=0
    _
  %s4 = ssub.s32 1, %s2
  %s5 = scalar_select 0, %s4, %s2
  $region1: #{tpu_custom_call.1} parent=0
    #allocation2 [shape = 'u8[4096]{0}', space=vmem, size = 0x1000, scoped, tag = 'input window, operand 0, single buffered']
    #allocation3 [shape = 's32[1]{0}', space=sflag, size = 0x4, scoped, tag = 'scoped memory for tpu_custom_call.1']
    #allocation4 [shape = 's32[1]{0}', space=sflag, size = 0x4, scoped, tag = 'scoped memory for tpu_custom_call.1']
    #allocation5 [shape = 'u8[4096]{0}', space=vmem, size = 0x1000, scoped, tag = 'output window, operand 0, single buffered']
    %6 = vsyncpa [#allocation3], 0
    %7 = vsyncpa [#allocation4], 0
    // Predicated region
    $region2: #{tpu_custom_call.1} parent=1 // pred_check
      _
    $region3: #{tpu_custom_call.1} parent=1 // pred_check_branch
      %9 = sbr.rel (0) target = $region5
    $region4: #{tpu_custom_call.1} parent=1 // pred_region
      %s11 = ssub.s32 128, 128
      %12 = vsyncadd [#allocation3], %s11
      %s14 = sshll.u32 [#allocation2], 4
      %s15 = int_to_ptr.vmem [resolvable:$true] %s14
      %17 = dma.hbm_to_vmem [thread:$0]  %s0, 128, %s15, [#allocation3]
    $region5: #{tpu_custom_call.1} parent=1 // pred_fallthru
      _
    // Predicated region
    $region6: #{tpu_custom_call.1} parent=1 // pred_check
      _
    $region7: #{tpu_custom_call.1} parent=1 // pred_check_branch
      %19 = sbr.rel (0) target = $region9
    $region8: #{tpu_custom_call.1} parent=1 // pred_region
      %20 = dma.done [#allocation3], 128
    $region9: #{tpu_custom_call.1} parent=1 // pred_fallthru
      _
    %v21 = vld [vmem:[#allocation2] sm:$0xff]
    %22 = vrot.lane.b32.xlu0 %v21, 1
    %v23 = vpop.permute.xlu0 %22
    %24 = vst [vmem:[#allocation5] sm:$0xff] %v23
    // Predicated region
    $region10: #{tpu_custom_call.1} parent=1 // pred_check
      _
    $region11: #{tpu_custom_call.1} parent=1 // pred_check_branch
      %26 = sbr.rel (0) target = $region13
    $region12: #{tpu_custom_call.1} parent=1 // pred_region
      %s28 = ssub.s32 128, 128
      %29 = vsyncadd [#allocation4], %s28
      %s31 = sshll.u32 [#allocation5], 4
      %s32 = int_to_ptr.vmem [resolvable:$true] %s31
      %34 = dma.vmem_to_hbm [thread:$0]  %s32, 128, %s1, [#allocation4]
    $region13: #{tpu_custom_call.1} parent=1 // pred_fallthru
      _
    // Predicated region
    $region14: #{tpu_custom_call.1} parent=1 // pred_check
      _
    $region15: #{tpu_custom_call.1} parent=1 // pred_check_branch
      %36 = sbr.rel (0) target = $region17
    $region16: #{tpu_custom_call.1} parent=1 // pred_region
      %37 = dma.done [#allocation4], 128
    $region17: #{tpu_custom_call.1} parent=1 // pred_fallthru
      _
    %38 = vsyncpa [#allocation3], 1
    %39 = vsyncpa [#allocation4], 1

// kernel: tpu_custom_call.1
$region0: #{tpu_custom_call.1}
  #allocation0 [shape = 'u32[]', space=smem, size = 0x4, offset = 0x4, fixed_abs, tag = 'smem constant byte address 0x4 - core index']
  #allocation1 [shape = 'u32[144,128]{1,0:T(1,128)}', space=vmem, size = 0x12000, scoped, tag = 'internal scratch']
  #allocation2 [shape = 'f32[1]{0:T(128)S(6)}', space=smem, size = 0x200, scoped, tag = 'scoped memory for tpu_custom_call.1']
  %s0 = inlined_call_operand.vmem [shape: f32[98], index: 0, kind: input, shape index: {}]
  %s1 = inlined_call_operand.<no memory space> [shape: f32[1], index: 1, kind: input, shape index: {}]
  %s2 = inlined_call_operand.hbm [shape: f32[7,256], index: 2, kind: input, shape index: {}]
  %s3 = inlined_call_operand.hbm [shape: f32[7,256], index: 3, kind: input, shape index: {}]
  %s4 = inlined_call_operand.hbm [shape: f32[2,4,256], index: 4, kind: input, shape index: {}]
  %s5 = inlined_call_operand.hbm [shape: f32[2,4,256], index: 5, kind: output, shape index: {}]
  %s6 = sld [smem:[#allocation0]]
  $region69: #{tpu_custom_call.1} parent=0
    _
  %s8 = ssub.s32 1, %s6
  %s9 = scalar_select 0, %s8, %s6
  %10 = sst [smem:[#allocation2]] %s1
  $region1: #{tpu_custom_call.1} parent=0
    #allocation3 [shape = 'u8[512]{0}', space=smem, size = 0x200, scoped, tag = 'input window, operand 0, single buffered']
    #allocation4 [shape = 's32[2]{0}', space=sflag, size = 0x8, scoped, tag = 'scoped memory for tpu_custom_call.1']
    #allocation5 [shape = 's32[2]{0}', space=sflag, size = 0x8, scoped, tag = 'scoped memory for tpu_custom_call.1']
    #allocation6 [shape = 's32[2]{0}', space=sflag, size = 0x8, scoped, tag = 'scoped memory for tpu_custom_call.1']
    #allocation7 [shape = 'u8[8192]{0}', space=vmem, size = 0x2000, scoped, tag = 'input window, operand 2, single buffered']
    #allocation8 [shape = 'u8[8192]{0}', space=vmem, size = 0x2000, scoped, tag = 'input window, operand 3, single buffered']
    #allocation9 [shape = 's32[1]{0}', space=sflag, size = 0x4, scoped, tag = 'scoped memory for tpu_custom_call.1']
    #allocation10 [shape = 'u8[8192]{0}', space=vmem, size = 0x2000, scoped, tag = 'input window, operand 4']
    #allocation11 [shape = 'u8[8192]{0}', space=vmem, size = 0x2000, scoped, tag = 'output window, operand 0']
    %11 = vsyncpa [#allocation6], 0
    %12 = vsyncpa [#allocation4], 0
    %13 = vsyncpa [#allocation9], 0
    %14 = vsyncpa [#allocation5], 0
    %s15 = scalar_lea.sflag [#allocation5], 1
    %16 = vsyncpa %s15, 0
    loop: start=0, step=1, limit=4
    $region2: #{tpu_custom_call.1} parent=1 // loop_pre_header
      _
    $region3: #{tpu_custom_call.1} parent=1 // loop_header
      %s18 = sphi 0, %s22
      %p19 = scmp.ge.s32.totalorder %s18, 4
      %s26 = sphi 0, %s26
      %s28 = sphi 0, %s26
      %s29 = sphi 0, %s28
      %s43 = sphi 0, %s29
      %s47 = sphi 0, %s47
      %s49 = sphi 0, %s47
      %s50 = sphi 0, %s49
      %s64 = sphi 0, %s50
      %s68 = sphi 0, %s68
      %s70 = sphi 0, %s68
      %s71 = sphi 0, %s70
      %s85 = sphi 0, %s71
      %s89 = sphi 0, %s89
      %s91 = sphi 0, %s89
      %s92 = sphi 0, %s91
      %s106 = sphi 0, %s92
      %s112 = sphi 0, %s114
      %s115 = sphi 0, %s112
      %s116 = sphi 0, %s115
      %s132 = sphi 0, %s116
      %s138 = sphi 0, %s140
      %s141 = sphi 0, %s138
      %s142 = sphi 0, %s141
      %s158 = sphi 0, %s142
    $region4: #{tpu_custom_call.1} parent=1 // loop_header_branch
      %21 = sbr.rel (%p19) target = $region8
    $region5: #{tpu_custom_call.1} parent=1 // loop_body
      %s23 = ssub.s32 %s18, 1
      %s24 = ssub.s32 %s18, 2
      %s25 = sadd.s32 %s18, 1
      %s27 = sadd.s32 %s26, 1
      %p30 = scmp.eq.s32.totalorder %s18, 1
      %p31 = scmp.ne.s32.totalorder %s26, %s28
      %p32 = scmp.eq.s32.totalorder %s18, 0
      %p33 = por %p31, %p32
      %p34 = scmp.ne.s32.totalorder %s26, %s28
      %p35 = scmp.eq.s32.totalorder %s23, 1
      %p36 = por %p34, %p35
      %p37 = scmp.ne.s32.totalorder %s28, %s29
      %p38 = scmp.eq.s32.totalorder %s23, 0
      %p39 = por %p37, %p38
      %p40 = scmp.ne.s32.totalorder %s28, %s29
      %p41 = scmp.eq.s32.totalorder %s24, 1
      %p42 = por %p40, %p41
      %p44 = scmp.ne.s32.totalorder %s29, %s43
      %p45 = scmp.eq.s32.totalorder %s24, 0
      %p46 = por %p44, %p45
      %s48 = sadd.s32 %s47, 1
      %p51 = scmp.eq.s32.totalorder %s18, 1
      %p52 = scmp.ne.s32.totalorder %s47, %s49
      %p53 = scmp.eq.s32.totalorder %s18, 0
      %p54 = por %p52, %p53
      %p55 = scmp.ne.s32.totalorder %s47, %s49
      %p56 = scmp.eq.s32.totalorder %s23, 1
      %p57 = por %p55, %p56
      %p58 = scmp.ne.s32.totalorder %s49, %s50
      %p59 = scmp.eq.s32.totalorder %s23, 0
      %p60 = por %p58, %p59
      %p61 = scmp.ne.s32.totalorder %s49, %s50
      %p62 = scmp.eq.s32.totalorder %s24, 1
      %p63 = por %p61, %p62
      %p65 = scmp.ne.s32.totalorder %s50, %s64
      %p66 = scmp.eq.s32.totalorder %s24, 0
      %p67 = por %p65, %p66
      %s69 = sadd.s32 %s68, 1
      %p72 = scmp.eq.s32.totalorder %s18, 1
      %p73 = scmp.ne.s32.totalorder %s68, %s70
      %p74 = scmp.eq.s32.totalorder %s18, 0
      %p75 = por %p73, %p74
      %p76 = scmp.ne.s32.totalorder %s68, %s70
      %p77 = scmp.eq.s32.totalorder %s23, 1
      %p78 = por %p76, %p77
      %p79 = scmp.ne.s32.totalorder %s70, %s71
      %p80 = scmp.eq.s32.totalorder %s23, 0
      %p81 = por %p79, %p80
      %p82 = scmp.ne.s32.totalorder %s70, %s71
      %p83 = scmp.eq.s32.totalorder %s24, 1
      %p84 = por %p82, %p83
      %p86 = scmp.ne.s32.totalorder %s71, %s85
      %p87 = scmp.eq.s32.totalorder %s24, 0
      %p88 = por %p86, %p87
      %s90 = sadd.s32 %s89, 1
      %p93 = scmp.eq.s32.totalorder %s18, 1
      %p94 = scmp.ne.s32.totalorder %s89, %s91
      %p95 = scmp.eq.s32.totalorder %s18, 0
      %p96 = por %p94, %p95
      %p97 = scmp.ne.s32.totalorder %s89, %s91
      %p98 = scmp.eq.s32.totalorder %s23, 1
      %p99 = por %p97, %p98
      %p100 = scmp.ne.s32.totalorder %s91, %s92
      %p101 = scmp.eq.s32.totalorder %s23, 0
      %p102 = por %p100, %p101
      %p103 = scmp.ne.s32.totalorder %s91, %s92
      %p104 = scmp.eq.s32.totalorder %s24, 1
      %p105 = por %p103, %p104
      %p107 = scmp.ne.s32.totalorder %s92, %s106
      %p108 = scmp.eq.s32.totalorder %s24, 0
      %p109 = por %p107, %p108
      %s110 = ssub.s32 %s18, %s25
      %p111 = scmp.eq.s32.totalorder %s110, 0
      %s113 = sadd.s32 %s112, 1
      %s114 = scalar_select %p111, %s112, %s113
      %p117 = pneg %p111
      %p118 = scmp.eq.s32.totalorder %s18, 1
      %p119 = por %p117, %p118
      %p120 = scmp.ne.s32.totalorder %s112, %s115
      %p121 = scmp.eq.s32.totalorder %s18, 0
      %p122 = por %p120, %p121
      %p123 = scmp.ne.s32.totalorder %s112, %s115
      %p124 = scmp.eq.s32.totalorder %s23, 1
      %p125 = por %p123, %p124
      %p126 = scmp.ne.s32.totalorder %s115, %s116
      %p127 = scmp.eq.s32.totalorder %s23, 0
      %p128 = por %p126, %p127
      %p129 = scmp.ne.s32.totalorder %s115, %s116
      %p130 = scmp.eq.s32.totalorder %s24, 1
      %p131 = por %p129, %p130
      %p133 = scmp.ne.s32.totalorder %s116, %s132
      %p134 = scmp.eq.s32.totalorder %s24, 0
      %p135 = por %p133, %p134
      %s136 = ssub.s32 %s18, %s25
      %p137 = scmp.eq.s32.totalorder %s136, 0
      %s139 = sadd.s32 %s138, 1
      %s140 = scalar_select %p137, %s138, %s139
      %p143 = pneg %p137
      %p144 = scmp.eq.s32.totalorder %s18, 1
      %p145 = por %p143, %p144
      %p146 = scmp.ne.s32.totalorder %s138, %s141
      %p147 = scmp.eq.s32.totalorder %s18, 0
      %p148 = por %p146, %p147
      %p149 = scmp.ne.s32.totalorder %s138, %s141
      %p150 = scmp.eq.s32.totalorder %s23, 1
      %p151 = por %p149, %p150
      %p152 = scmp.ne.s32.totalorder %s141, %s142
      %p153 = scmp.eq.s32.totalorder %s23, 0
      %p154 = por %p152, %p153
      %p155 = scmp.ne.s32.totalorder %s141, %s142
      %p156 = scmp.eq.s32.totalorder %s24, 1
      %p157 = por %p155, %p156
      %p159 = scmp.ne.s32.totalorder %s142, %s158
      %p160 = scmp.eq.s32.totalorder %s24, 0
      %p161 = por %p159, %p160
      %p162 = scmp.le.s32.totalorder 1, %s18
      %p163 = scmp.lt.s32.totalorder %s18, 3
      %p164 = pnand %p162, %p163
      %p165 = pneg %p164
      // Predicated region
      $region9: #{tpu_custom_call.1} parent=5 // pred_check
        _
      $region10: #{tpu_custom_call.1} parent=5 // pred_check_branch
        %167 = sbr.rel (%p164) target = $region12
      $region11: #{tpu_custom_call.1} parent=5 // pred_region
        %s168 = ssub.s32 %s18, 1
        // Predicated region
        $region13: #{tpu_custom_call.1} parent=11 // pred_check
          %p169 = pneg %p39
        $region14: #{tpu_custom_call.1} parent=11 // pred_check_branch
          %171 = sbr.rel (%p169) target = $region16
        $region15: #{tpu_custom_call.1} parent=11 // pred_region
          %s173 = ssub.s32 16, 16
          %174 = vsyncadd [#allocation6], %s173
          %s176 = sshll.u32 %s0, 4
          %s177 = int_to_ptr.vmem [resolvable:$true] %s176
          %179 = dma.vmem_to_smem %s177, 16, [#allocation3], [#allocation6]
        $region16: #{tpu_custom_call.1} parent=11 // pred_fallthru
          _
        // Predicated region
        $region17: #{tpu_custom_call.1} parent=11 // pred_check
          %p180 = pneg %p60
        $region18: #{tpu_custom_call.1} parent=11 // pred_check_branch
          %182 = sbr.rel (%p180) target = $region20
        $region19: #{tpu_custom_call.1} parent=11 // pred_region
          _
        $region20: #{tpu_custom_call.1} parent=11 // pred_fallthru
          _
        // Predicated region
        $region21: #{tpu_custom_call.1} parent=11 // pred_check
          %p183 = pneg %p81
        $region22: #{tpu_custom_call.1} parent=11 // pred_check_branch
          %185 = sbr.rel (%p183) target = $region24
        $region23: #{tpu_custom_call.1} parent=11 // pred_region
          %s187 = ssub.s32 256, 256
          %188 = vsyncadd [#allocation4], %s187
          %s190 = sshll.u32 [#allocation7], 4
          %s191 = int_to_ptr.vmem [resolvable:$true] %s190
          %193 = dma.hbm_to_vmem [thread:$0]  %s2, 256, %s191, [#allocation4]
        $region24: #{tpu_custom_call.1} parent=11 // pred_fallthru
          _
        // Predicated region
        $region25: #{tpu_custom_call.1} parent=11 // pred_check
          %p194 = pneg %p102
        $region26: #{tpu_custom_call.1} parent=11 // pred_check_branch
          %196 = sbr.rel (%p194) target = $region28
        $region27: #{tpu_custom_call.1} parent=11 // pred_region
          %s198 = ssub.s32 256, 256
          %199 = vsyncadd [#allocation9], %s198
          %s201 = sshll.u32 [#allocation8], 4
          %s202 = int_to_ptr.vmem [resolvable:$true] %s201
          %204 = dma.hbm_to_vmem [thread:$0]  %s3, 256, %s202, [#allocation9]
        $region28: #{tpu_custom_call.1} parent=11 // pred_fallthru
          _
      $region12: #{tpu_custom_call.1} parent=5 // pred_fallthru
        _
      %p205 = scmp.lt.s32.totalorder %s18, 2
      // Predicated region
      $region29: #{tpu_custom_call.1} parent=5 // pred_check
        %p206 = pneg %p205
      $region30: #{tpu_custom_call.1} parent=5 // pred_check_branch
        %208 = sbr.rel (%p206) target = $region32
      $region31: #{tpu_custom_call.1} parent=5 // pred_region
        // Predicated region
        $region33: #{tpu_custom_call.1} parent=31 // pred_check
          %p209 = pneg %p122
        $region34: #{tpu_custom_call.1} parent=31 // pred_check_branch
          %211 = sbr.rel (%p209) target = $region36
        $region35: #{tpu_custom_call.1} parent=31 // pred_region
          %s212 = sand.u32 %s18, 1
          %s213 = scalar_lea.sflag [#allocation4], %s212
          %s214 = sand.u32 %s112, 1
          %s215 = smul.addr %s214, 8
          %s216 = scalar_lea.vmem [#allocation10], %s215
          %s218 = ssub.s32 128, 128
          %219 = vsyncadd %s213, %s218
          %s220 = smul.addr %s18, 2
          %s221 = smul.addr %s220, 64
          %s222 = scalar_lea.hbm %s4, %s221
          %s224 = sshll.u32 %s216, 4
          %s225 = int_to_ptr.vmem [resolvable:$true] %s224
          %227 = dma.hbm_to_vmem [thread:$0]  %s222, 128, %s225, %s213
        $region36: #{tpu_custom_call.1} parent=31 // pred_fallthru
          _
      $region32: #{tpu_custom_call.1} parent=5 // pred_fallthru
        _
      %p228 = scmp.le.s32.totalorder 1, %s18
      %p229 = scmp.lt.s32.totalorder %s18, 3
      %p230 = pnand %p228, %p229
      %p231 = pneg %p230
      // Predicated region
      $region37: #{tpu_custom_call.1} parent=5 // pred_check
        _
      $region38: #{tpu_custom_call.1} parent=5 // pred_check_branch
        %233 = sbr.rel (%p230) target = $region40
      $region39: #{tpu_custom_call.1} parent=5 // pred_region
        %s234 = ssub.s32 %s18, 1
        // Predicated region
        $region41: #{tpu_custom_call.1} parent=39 // pred_check
          %p235 = pneg %p39
        $region42: #{tpu_custom_call.1} parent=39 // pred_check_branch
          %237 = sbr.rel (%p235) target = $region44
        $region43: #{tpu_custom_call.1} parent=39 // pred_region
          %238 = dma.done [#allocation6], 16
        $region44: #{tpu_custom_call.1} parent=39 // pred_fallthru
          _
        // Predicated region
        $region45: #{tpu_custom_call.1} parent=39 // pred_check
          %p239 = pneg %p81
        $region46: #{tpu_custom_call.1} parent=39 // pred_check_branch
          %241 = sbr.rel (%p239) target = $region48
        $region47: #{tpu_custom_call.1} parent=39 // pred_region
          %242 = dma.done [#allocation4], 256
        $region48: #{tpu_custom_call.1} parent=39 // pred_fallthru
          _
        // Predicated region
        $region49: #{tpu_custom_call.1} parent=39 // pred_check
          %p243 = pneg %p102
        $region50: #{tpu_custom_call.1} parent=39 // pred_check_branch
          %245 = sbr.rel (%p243) target = $region52
        $region51: #{tpu_custom_call.1} parent=39 // pred_region
          %246 = dma.done [#allocation9], 256
        $region52: #{tpu_custom_call.1} parent=39 // pred_fallthru
          _
        %s247 = sand.u32 %s23, 1
        %s248 = scalar_lea.sflag [#allocation4], %s247
        %s249 = sand.u32 %s115, 1
        %s250 = smul.addr %s249, 8
        %s251 = scalar_lea.vmem [#allocation10], %s250
        // Predicated region
        $region53: #{tpu_custom_call.1} parent=39 // pred_check
          %p252 = pneg %p128
        $region54: #{tpu_custom_call.1} parent=39 // pred_check_branch
          %254 = sbr.rel (%p252) target = $region56
        $region55: #{tpu_custom_call.1} parent=39 // pred_region
          %255 = dma.done %s248, 128
        $region56: #{tpu_custom_call.1} parent=39 // pred_fallthru
          _
        %256 = sfence
        %p257 = pneg %p39
        %p258 = pneg %p36
        %p259 = pneg %p60
        %p260 = pneg %p57
        %p261 = pneg %p81
        %p262 = pneg %p78
        %p263 = pneg %p102
        %p264 = pneg %p99
        %s265 = sand.u32 %s23, 1
        %s266 = scalar_lea.sflag [#allocation4], %s265
        %s267 = sand.u32 %s115, 1
        %s268 = smul.addr %s267, 8
        %s269 = scalar_lea.vmem [#allocation10], %s268
        %p270 = pneg %p128
        %p271 = pneg %p125
        %p272 = pneg %p154
        %p273 = pneg %p151
        %s274 = sand.u32 %s141, 1
        %s275 = scalar_lea.sflag [#allocation5], %s274
        %s276 = sand.u32 %s141, 1
        %s277 = smul.addr %s276, 8
        %s278 = scalar_lea.vmem [#allocation11], %s277
        %v279 = vld [vmem:[%s251] sm:$0xff]
        %v281 = vcombine.high %v279, %v279
        %vm283 = vcmask 1043456
        %v284 = vsel %vm283, %v279, 0.0
        %v285 = vrot.slane %v284, 4
        %v286 = vadd.f32 %v284, %v285
        %v287 = vrot.slane %v286, 2
        %v288 = vadd.f32 %v286, %v287
        %v289 = vrot.slane %v288, 1
        %v290 = vadd.f32 %v288, %v289
        %v291 = vsel %vm283, %v281, 0.0
        %v292 = vrot.slane %v291, 4
        %v293 = vadd.f32 %v291, %v292
        %v294 = vrot.slane %v293, 2
        %v295 = vadd.f32 %v293, %v294
        %v296 = vrot.slane %v295, 1
        %v297 = vadd.f32 %v295, %v296
        %v298 = vsel %vm283, %v279, -inf
        %v299 = vrot.slane %v298, 4
        %v300 = vmax.f32 %v298, %v299
        %v301 = vrot.slane %v300, 2
        %v302 = vmax.f32 %v300, %v301
        %v303 = vrot.slane %v302, 1
        %v304 = vmax.f32 %v302, %v303
        %v305 = vsel %vm283, %v281, -inf
        %v306 = vrot.slane %v305, 4
        %v307 = vmax.f32 %v305, %v306
        %v308 = vrot.slane %v307, 2
        %v309 = vmax.f32 %v307, %v308
        %v310 = vrot.slane %v309, 1
        %v311 = vmax.f32 %v309, %v310
        %v312 = vmul.f32 %v290, 0.25
        %v313 = vmul.f32 %v297, 0.25
        %v314 = vld [vmem:[#allocation7] ss:$8 sm:$0x3]
        %315 = vrot.lane.b32.xlu0 %v312, 48
        %v316 = vpop.permute.xlu0 %315
        %317 = vrot.lane.b32.xlu0 %v313, 48
        %v318 = vpop.permute.xlu0 %317
        %v319 = vlaneseq
        %v320 = vand.u32 %v319, 127
        %vm321 = vcmp.lt.s32.totalorder %v320, 48
        %v322 = vsel %vm321, %v316, %v318
        %v323 = vsel %vm321, %v318, %v316
        %v326 = vcombine.low %v323, %v322
        %v328 = vunpack.c.l.s4 1966171168
        %v329 = vunpack.c.0.s8 %v328
        %v330 = vlaneseq
        %v331 = vshrl.u32 %v330, 7
        %v332 = vsub.s32 %v329, %v331
        %v333 = vrot.slane %v326, %v332
        %v335 = vunpack.c.l.s4 1966171168
        %v336 = vunpack.c.0.s8 %v335
        %v337 = vlaneseq
        %v338 = vshrl.u32 %v337, 7
        %v339 = vsub.s32 %v336, %v338
        %v340 = vrot.slane %v333, %v339
        %v342 = vmul.f32 %v314, %v340
        %343 = vrot.lane.b32.xlu0 %v304, 48
        %v344 = vpop.permute.xlu0 %343
        %345 = vrot.lane.b32.xlu0 %v311, 48
        %v346 = vpop.permute.xlu0 %345
        %v347 = vsel %vm321, %v344, %v346
        %v348 = vsel %vm321, %v346, %v344
        %v351 = vcombine.low %v348, %v347
        %v353 = vunpack.c.l.s4 1966171168
        %v354 = vunpack.c.0.s8 %v353
        %v355 = vlaneseq
        %v356 = vshrl.u32 %v355, 7
        %v357 = vsub.s32 %v354, %v356
        %v358 = vrot.slane %v351, %v357
        %v360 = vunpack.c.l.s4 1966171168
        %v361 = vunpack.c.0.s8 %v360
        %v362 = vlaneseq
        %v363 = vshrl.u32 %v362, 7
        %v364 = vsub.s32 %v361, %v363
        %v365 = vrot.slane %v358, %v364
        %v367 = vmul.f32 %v314, %v365
        %s368 = sld [smem:[#allocation3]]
        %v369 = vstv %s368
        %v370 = vmul.f32 %v369, %v342
        %s371 = sld [smem:[#allocation3 + $0x31]]
        %v372 = vstv %s371
        %v373 = vmul.f32 %v372, %v367
        %v374 = vadd.f32 %v370, %v373
        %s375 = sld [smem:[#allocation3 + $0x1]]
        %v376 = vstv %s375
        %v377 = vmul.f32 %v376, %v342
        %s378 = sld [smem:[#allocation3 + $0x32]]
        %v379 = vstv %s378
        %v380 = vmul.f32 %v379, %v367
        %v381 = vadd.f32 %v377, %v380
        %s382 = sld [smem:[#allocation3 + $0x2]]
        %v383 = vstv %s382
        %v384 = vmul.f32 %v383, %v342
        %s385 = sld [smem:[#allocation3 + $0x33]]
        %v386 = vstv %s385
        %v387 = vmul.f32 %v386, %v367
        %v388 = vadd.f32 %v384, %v387
        %s389 = sld [smem:[#allocation3 + $0x3]]
        %v390 = vstv %s389
        %v391 = vmul.f32 %v390, %v342
        %s392 = sld [smem:[#allocation3 + $0x34]]
        %v393 = vstv %s392
        %v394 = vmul.f32 %v393, %v367
        %v395 = vadd.f32 %v391, %v394
        %s396 = sld [smem:[#allocation3 + $0x4]]
        %v397 = vstv %s396
        %v398 = vmul.f32 %v397, %v342
        %s399 = sld [smem:[#allocation3 + $0x35]]
        %v400 = vstv %s399
        %v401 = vmul.f32 %v400, %v367
        %v402 = vadd.f32 %v398, %v401
        %s403 = sld [smem:[#allocation3 + $0x5]]
        %v404 = vstv %s403
        %v405 = vmul.f32 %v404, %v342
        %s406 = sld [smem:[#allocation3 + $0x36]]
        %v407 = vstv %s406
        %v408 = vmul.f32 %v407, %v367
        %v409 = vadd.f32 %v405, %v408
        %s410 = sld [smem:[#allocation3 + $0x6]]
        %v411 = vstv %s410
        %v412 = vmul.f32 %v411, %v342
        %s413 = sld [smem:[#allocation3 + $0x37]]
        %v414 = vstv %s413
        %v415 = vmul.f32 %v414, %v367
        %v416 = vadd.f32 %v412, %v415
        %s417 = scalar_lea.vmem [#allocation7], 1
        %v418 = vld [vmem:[%s417] ss:$8 sm:$0x3]
        %419 = vrot.lane.b32.xlu0 %v312, 32
        %v420 = vpop.permute.xlu0 %419
        %421 = vrot.lane.b32.xlu0 %v313, 32
        %v422 = vpop.permute.xlu0 %421
        %vm423 = vcmp.lt.s32.totalorder %v320, 32
        %v424 = vsel %vm423, %v420, %v422
        %v425 = vsel %vm423, %v422, %v420
        %v428 = vcombine.low %v425, %v424
        %v430 = vunpack.c.l.s4 1966171168
        %v431 = vunpack.c.0.s8 %v430
        %v432 = vlaneseq
        %v433 = vshrl.u32 %v432, 7
        %v434 = vsub.s32 %v431, %v433
        %v435 = vrot.slane %v428, %v434
        %v437 = vunpack.c.l.s4 1966171168
        %v438 = vunpack.c.0.s8 %v437
        %v439 = vlaneseq
        %v440 = vshrl.u32 %v439, 7
        %v441 = vsub.s32 %v438, %v440
        %v442 = vrot.slane %v435, %v441
        %v444 = vmul.f32 %v418, %v442
        %445 = vrot.lane.b32.xlu0 %v304, 32
        %v446 = vpop.permute.xlu0 %445
        %447 = vrot.lane.b32.xlu0 %v311, 32
        %v448 = vpop.permute.xlu0 %447
        %v449 = vsel %vm423, %v446, %v448
        %v450 = vsel %vm423, %v448, %v446
        %v453 = vcombine.low %v450, %v449
        %v455 = vunpack.c.l.s4 1966171168
        %v456 = vunpack.c.0.s8 %v455
        %v457 = vlaneseq
        %v458 = vshrl.u32 %v457, 7
        %v459 = vsub.s32 %v456, %v458
        %v460 = vrot.slane %v453, %v459
        %v462 = vunpack.c.l.s4 1966171168
        %v463 = vunpack.c.0.s8 %v462
        %v464 = vlaneseq
        %v465 = vshrl.u32 %v464, 7
        %v466 = vsub.s32 %v463, %v465
        %v467 = vrot.slane %v460, %v466
        %v469 = vmul.f32 %v418, %v467
        %s470 = sld [smem:[#allocation3 + $0x7]]
        %v471 = vstv %s470
        %v472 = vmul.f32 %v471, %v444
        %s473 = sld [smem:[#allocation3 + $0x38]]
        %v474 = vstv %s473
        %v475 = vmul.f32 %v474, %v469
        %v476 = vadd.f32 %v472, %v475
        %v477 = vadd.f32 %v374, %v476
        %s478 = sld [smem:[#allocation3 + $0x8]]
        %v479 = vstv %s478
        %v480 = vmul.f32 %v479, %v444
        %s481 = sld [smem:[#allocation3 + $0x39]]
        %v482 = vstv %s481
        %v483 = vmul.f32 %v482, %v469
        %v484 = vadd.f32 %v480, %v483
        %v485 = vadd.f32 %v381, %v484
        %s486 = sld [smem:[#allocation3 + $0x9]]
        %v487 = vstv %s486
        %v488 = vmul.f32 %v487, %v444
        %s489 = sld [smem:[#allocation3 + $0x3a]]
        %v490 = vstv %s489
        %v491 = vmul.f32 %v490, %v469
        %v492 = vadd.f32 %v488, %v491
        %v493 = vadd.f32 %v388, %v492
        %s494 = sld [smem:[#allocation3 + $0xa]]
        %v495 = vstv %s494
        %v496 = vmul.f32 %v495, %v444
        %s497 = sld [smem:[#allocation3 + $0x3b]]
        %v498 = vstv %s497
        %v499 = vmul.f32 %v498, %v469
        %v500 = vadd.f32 %v496, %v499
        %v501 = vadd.f32 %v395, %v500
        %s502 = sld [smem:[#allocation3 + $0xb]]
        %v503 = vstv %s502
        %v504 = vmul.f32 %v503, %v444
        %s505 = sld [smem:[#allocation3 + $0x3c]]
        %v506 = vstv %s505
        %v507 = vmul.f32 %v506, %v469
        %v508 = vadd.f32 %v504, %v507
        %v509 = vadd.f32 %v402, %v508
        %s510 = sld [smem:[#allocation3 + $0xc]]
        %v511 = vstv %s510
        %v512 = vmul.f32 %v511, %v444
        %s513 = sld [smem:[#allocation3 + $0x3d]]
        %v514 = vstv %s513
        %v515 = vmul.f32 %v514, %v469
        %v516 = vadd.f32 %v512, %v515
        %v517 = vadd.f32 %v409, %v516
        %s518 = sld [smem:[#allocation3 + $0xd]]
        %v519 = vstv %s518
        %v520 = vmul.f32 %v519, %v444
        %s521 = sld [smem:[#allocation3 + $0x3e]]
        %v522 = vstv %s521
        %v523 = vmul.f32 %v522, %v469
        %v524 = vadd.f32 %v520, %v523
        %v525 = vadd.f32 %v416, %v524
        %s526 = scalar_lea.vmem [#allocation7], 2
        %v527 = vld [vmem:[%s526] ss:$8 sm:$0x3]
        %528 = vrot.lane.b32.xlu0 %v312, 16
        %v529 = vpop.permute.xlu0 %528
        %530 = vrot.lane.b32.xlu0 %v313, 16
        %v531 = vpop.permute.xlu0 %530
        %vm532 = vcmp.lt.s32.totalorder %v320, 16
        %v533 = vsel %vm532, %v529, %v531
        %v534 = vsel %vm532, %v531, %v529
        %v537 = vcombine.low %v534, %v533
        %v539 = vunpack.c.l.s4 1966171168
        %v540 = vunpack.c.0.s8 %v539
        %v541 = vlaneseq
        %v542 = vshrl.u32 %v541, 7
        %v543 = vsub.s32 %v540, %v542
        %v544 = vrot.slane %v537, %v543
        %v546 = vunpack.c.l.s4 1966171168
        %v547 = vunpack.c.0.s8 %v546
        %v548 = vlaneseq
        %v549 = vshrl.u32 %v548, 7
        %v550 = vsub.s32 %v547, %v549
        %v551 = vrot.slane %v544, %v550
        %v553 = vmul.f32 %v527, %v551
        %554 = vrot.lane.b32.xlu0 %v304, 16
        %v555 = vpop.permute.xlu0 %554
        %556 = vrot.lane.b32.xlu0 %v311, 16
        %v557 = vpop.permute.xlu0 %556
        %v558 = vsel %vm532, %v555, %v557
        %v559 = vsel %vm532, %v557, %v555
        %v562 = vcombine.low %v559, %v558
        %v564 = vunpack.c.l.s4 1966171168
        %v565 = vunpack.c.0.s8 %v564
        %v566 = vlaneseq
        %v567 = vshrl.u32 %v566, 7
        %v568 = vsub.s32 %v565, %v567
        %v569 = vrot.slane %v562, %v568
        %v571 = vunpack.c.l.s4 1966171168
        %v572 = vunpack.c.0.s8 %v571
        %v573 = vlaneseq
        %v574 = vshrl.u32 %v573, 7
        %v575 = vsub.s32 %v572, %v574
        %v576 = vrot.slane %v569, %v575
        %v578 = vmul.f32 %v527, %v576
        %s579 = sld [smem:[#allocation3 + $0xe]]
        %v580 = vstv %s579
        %v581 = vmul.f32 %v580, %v553
        %s582 = sld [smem:[#allocation3 + $0x3f]]
        %v583 = vstv %s582
        %v584 = vmul.f32 %v583, %v578
        %v585 = vadd.f32 %v581, %v584
        %v586 = vadd.f32 %v477, %v585
        %s587 = sld [smem:[#allocation3 + $0xf]]
        %v588 = vstv %s587
        %v589 = vmul.f32 %v588, %v553
        %s590 = sld [smem:[#allocation3 + $0x40]]
        %v591 = vstv %s590
        %v592 = vmul.f32 %v591, %v578
        %v593 = vadd.f32 %v589, %v592
        %v594 = vadd.f32 %v485, %v593
        %s595 = sld [smem:[#allocation3 + $0x10]]
        %v596 = vstv %s595
        %v597 = vmul.f32 %v596, %v553
        %s598 = sld [smem:[#allocation3 + $0x41]]
        %v599 = vstv %s598
        %v600 = vmul.f32 %v599, %v578
        %v601 = vadd.f32 %v597, %v600
        %v602 = vadd.f32 %v493, %v601
        %s603 = sld [smem:[#allocation3 + $0x11]]
        %v604 = vstv %s603
        %v605 = vmul.f32 %v604, %v553
        %s606 = sld [smem:[#allocation3 + $0x42]]
        %v607 = vstv %s606
        %v608 = vmul.f32 %v607, %v578
        %v609 = vadd.f32 %v605, %v608
        %v610 = vadd.f32 %v501, %v609
        %s611 = sld [smem:[#allocation3 + $0x12]]
        %v612 = vstv %s611
        %v613 = vmul.f32 %v612, %v553
        %s614 = sld [smem:[#allocation3 + $0x43]]
        %v615 = vstv %s614
        %v616 = vmul.f32 %v615, %v578
        %v617 = vadd.f32 %v613, %v616
        %v618 = vadd.f32 %v509, %v617
        %s619 = sld [smem:[#allocation3 + $0x13]]
        %v620 = vstv %s619
        %v621 = vmul.f32 %v620, %v553
        %s622 = sld [smem:[#allocation3 + $0x44]]
        %v623 = vstv %s622
        %v624 = vmul.f32 %v623, %v578
        %v625 = vadd.f32 %v621, %v624
        %v626 = vadd.f32 %v517, %v625
        %s627 = sld [smem:[#allocation3 + $0x14]]
        %v628 = vstv %s627
        %v629 = vmul.f32 %v628, %v553
        %s630 = sld [smem:[#allocation3 + $0x45]]
        %v631 = vstv %s630
        %v632 = vmul.f32 %v631, %v578
        %v633 = vadd.f32 %v629, %v632
        %v634 = vadd.f32 %v525, %v633
        %s635 = scalar_lea.vmem [#allocation7], 3
        %v636 = vld [vmem:[%s635] ss:$8 sm:$0x3]
        %v639 = vcombine.low %v312, %v313
        %v641 = vunpack.c.l.s4 1966171168
        %v642 = vunpack.c.0.s8 %v641
        %v643 = vlaneseq
        %v644 = vshrl.u32 %v643, 7
        %v645 = vsub.s32 %v642, %v644
        %v646 = vrot.slane %v639, %v645
        %v648 = vunpack.c.l.s4 1966171168
        %v649 = vunpack.c.0.s8 %v648
        %v650 = vlaneseq
        %v651 = vshrl.u32 %v650, 7
        %v652 = vsub.s32 %v649, %v651
        %v653 = vrot.slane %v646, %v652
        %v655 = vmul.f32 %v636, %v653
        %v658 = vcombine.low %v304, %v311
        %v660 = vunpack.c.l.s4 1966171168
        %v661 = vunpack.c.0.s8 %v660
        %v662 = vlaneseq
        %v663 = vshrl.u32 %v662, 7
        %v664 = vsub.s32 %v661, %v663
        %v665 = vrot.slane %v658, %v664
        %v667 = vunpack.c.l.s4 1966171168
        %v668 = vunpack.c.0.s8 %v667
        %v669 = vlaneseq
        %v670 = vshrl.u32 %v669, 7
        %v671 = vsub.s32 %v668, %v670
        %v672 = vrot.slane %v665, %v671
        %v674 = vmul.f32 %v636, %v672
        %s675 = sld [smem:[#allocation3 + $0x15]]
        %v676 = vstv %s675
        %v677 = vmul.f32 %v676, %v655
        %s678 = sld [smem:[#allocation3 + $0x46]]
        %v679 = vstv %s678
        %v680 = vmul.f32 %v679, %v674
        %v681 = vadd.f32 %v677, %v680
        %v682 = vadd.f32 %v586, %v681
        %s683 = sld [smem:[#allocation3 + $0x16]]
        %v684 = vstv %s683
        %v685 = vmul.f32 %v684, %v655
        %s686 = sld [smem:[#allocation3 + $0x47]]
        %v687 = vstv %s686
        %v688 = vmul.f32 %v687, %v674
        %v689 = vadd.f32 %v685, %v688
        %v690 = vadd.f32 %v594, %v689
        %s691 = sld [smem:[#allocation3 + $0x17]]
        %v692 = vstv %s691
        %v693 = vmul.f32 %v692, %v655
        %s694 = sld [smem:[#allocation3 + $0x48]]
        %v695 = vstv %s694
        %v696 = vmul.f32 %v695, %v674
        %v697 = vadd.f32 %v693, %v696
        %v698 = vadd.f32 %v602, %v697
        %s699 = sld [smem:[#allocation3 + $0x18]]
        %v700 = vstv %s699
        %v701 = vmul.f32 %v700, %v655
        %s702 = sld [smem:[#allocation3 + $0x49]]
        %v703 = vstv %s702
        %v704 = vmul.f32 %v703, %v674
        %v705 = vadd.f32 %v701, %v704
        %v706 = vadd.f32 %v610, %v705
        %s707 = sld [smem:[#allocation3 + $0x19]]
        %v708 = vstv %s707
        %v709 = vmul.f32 %v708, %v655
        %s710 = sld [smem:[#allocation3 + $0x4a]]
        %v711 = vstv %s710
        %v712 = vmul.f32 %v711, %v674
        %v713 = vadd.f32 %v709, %v712
        %v714 = vadd.f32 %v618, %v713
        %s715 = sld [smem:[#allocation3 + $0x1a]]
        %v716 = vstv %s715
        %v717 = vmul.f32 %v716, %v655
        %s718 = sld [smem:[#allocation3 + $0x4b]]
        %v719 = vstv %s718
        %v720 = vmul.f32 %v719, %v674
        %v721 = vadd.f32 %v717, %v720
        %v722 = vadd.f32 %v626, %v721
        %s723 = sld [smem:[#allocation3 + $0x1b]]
        %v724 = vstv %s723
        %v725 = vmul.f32 %v724, %v655
        %s726 = sld [smem:[#allocation3 + $0x4c]]
        %v727 = vstv %s726
        %v728 = vmul.f32 %v727, %v674
        %v729 = vadd.f32 %v725, %v728
        %v730 = vadd.f32 %v634, %v729
        %s731 = scalar_lea.vmem [#allocation7], 4
        %v732 = vld [vmem:[%s731] ss:$8 sm:$0x3]
        %733 = vrot.lane.b32.xlu0 %v312, 112
        %v734 = vpop.permute.xlu0 %733
        %735 = vrot.lane.b32.xlu0 %v313, 112
        %v736 = vpop.permute.xlu0 %735
        %vm737 = vcmp.lt.s32.totalorder %v320, 112
        %v738 = vsel %vm737, %v734, %v736
        %v739 = vsel %vm737, %v736, %v734
        %v742 = vcombine.low %v738, %v739
        %v744 = vunpack.c.l.s4 1966171168
        %v745 = vunpack.c.0.s8 %v744
        %v746 = vlaneseq
        %v747 = vshrl.u32 %v746, 7
        %v748 = vsub.s32 %v745, %v747
        %v749 = vrot.slane %v742, %v748
        %v751 = vunpack.c.l.s4 1966171168
        %v752 = vunpack.c.0.s8 %v751
        %v753 = vlaneseq
        %v754 = vshrl.u32 %v753, 7
        %v755 = vsub.s32 %v752, %v754
        %v756 = vrot.slane %v749, %v755
        %v758 = vmul.f32 %v732, %v756
        %759 = vrot.lane.b32.xlu0 %v304, 112
        %v760 = vpop.permute.xlu0 %759
        %761 = vrot.lane.b32.xlu0 %v311, 112
        %v762 = vpop.permute.xlu0 %761
        %v763 = vsel %vm737, %v760, %v762
        %v764 = vsel %vm737, %v762, %v760
        %v767 = vcombine.low %v763, %v764
        %v769 = vunpack.c.l.s4 1966171168
        %v770 = vunpack.c.0.s8 %v769
        %v771 = vlaneseq
        %v772 = vshrl.u32 %v771, 7
        %v773 = vsub.s32 %v770, %v772
        %v774 = vrot.slane %v767, %v773
        %v776 = vunpack.c.l.s4 1966171168
        %v777 = vunpack.c.0.s8 %v776
        %v778 = vlaneseq
        %v779 = vshrl.u32 %v778, 7
        %v780 = vsub.s32 %v777, %v779
        %v781 = vrot.slane %v774, %v780
        %v783 = vmul.f32 %v732, %v781
        %s784 = sld [smem:[#allocation3 + $0x1c]]
        %v785 = vstv %s784
        %v786 = vmul.f32 %v785, %v758
        %s787 = sld [smem:[#allocation3 + $0x4d]]
        %v788 = vstv %s787
        %v789 = vmul.f32 %v788, %v783
        %v790 = vadd.f32 %v786, %v789
        %v791 = vadd.f32 %v682, %v790
        %s792 = sld [smem:[#allocation3 + $0x1d]]
        %v793 = vstv %s792
        %v794 = vmul.f32 %v793, %v758
        %s795 = sld [smem:[#allocation3 + $0x4e]]
        %v796 = vstv %s795
        %v797 = vmul.f32 %v796, %v783
        %v798 = vadd.f32 %v794, %v797
        %v799 = vadd.f32 %v690, %v798
        %s800 = sld [smem:[#allocation3 + $0x1e]]
        %v801 = vstv %s800
        %v802 = vmul.f32 %v801, %v758
        %s803 = sld [smem:[#allocation3 + $0x4f]]
        %v804 = vstv %s803
        %v805 = vmul.f32 %v804, %v783
        %v806 = vadd.f32 %v802, %v805
        %v807 = vadd.f32 %v698, %v806
        %s808 = sld [smem:[#allocation3 + $0x1f]]
        %v809 = vstv %s808
        %v810 = vmul.f32 %v809, %v758
        %s811 = sld [smem:[#allocation3 + $0x50]]
        %v812 = vstv %s811
        %v813 = vmul.f32 %v812, %v783
        %v814 = vadd.f32 %v810, %v813
        %v815 = vadd.f32 %v706, %v814
        %s816 = sld [smem:[#allocation3 + $0x20]]
        %v817 = vstv %s816
        %v818 = vmul.f32 %v817, %v758
        %s819 = sld [smem:[#allocation3 + $0x51]]
        %v820 = vstv %s819
        %v821 = vmul.f32 %v820, %v783
        %v822 = vadd.f32 %v818, %v821
        %v823 = vadd.f32 %v714, %v822
        %s824 = sld [smem:[#allocation3 + $0x21]]
        %v825 = vstv %s824
        %v826 = vmul.f32 %v825, %v758
        %s827 = sld [smem:[#allocation3 + $0x52]]
        %v828 = vstv %s827
        %v829 = vmul.f32 %v828, %v783
        %v830 = vadd.f32 %v826, %v829
        %v831 = vadd.f32 %v722, %v830
        %s832 = sld [smem:[#allocation3 + $0x22]]
        %v833 = vstv %s832
        %v834 = vmul.f32 %v833, %v758
        %s835 = sld [smem:[#allocation3 + $0x53]]
        %v836 = vstv %s835
        %v837 = vmul.f32 %v836, %v783
        %v838 = vadd.f32 %v834, %v837
        %v839 = vadd.f32 %v730, %v838
        %s840 = scalar_lea.vmem [#allocation7], 5
        %v841 = vld [vmem:[%s840] ss:$8 sm:$0x3]
        %842 = vrot.lane.b32.xlu0 %v312, 96
        %v843 = vpop.permute.xlu0 %842
        %844 = vrot.lane.b32.xlu0 %v313, 96
        %v845 = vpop.permute.xlu0 %844
        %vm846 = vcmp.lt.s32.totalorder %v320, 96
        %v847 = vsel %vm846, %v843, %v845
        %v848 = vsel %vm846, %v845, %v843
        %v851 = vcombine.low %v847, %v848
        %v853 = vunpack.c.l.s4 1966171168
        %v854 = vunpack.c.0.s8 %v853
        %v855 = vlaneseq
        %v856 = vshrl.u32 %v855, 7
        %v857 = vsub.s32 %v854, %v856
        %v858 = vrot.slane %v851, %v857
        %v860 = vunpack.c.l.s4 1966171168
        %v861 = vunpack.c.0.s8 %v860
        %v862 = vlaneseq
        %v863 = vshrl.u32 %v862, 7
        %v864 = vsub.s32 %v861, %v863
        %v865 = vrot.slane %v858, %v864
        %v867 = vmul.f32 %v841, %v865
        %868 = vrot.lane.b32.xlu0 %v304, 96
        %v869 = vpop.permute.xlu0 %868
        %870 = vrot.lane.b32.xlu0 %v311, 96
        %v871 = vpop.permute.xlu0 %870
        %v872 = vsel %vm846, %v869, %v871
        %v873 = vsel %vm846, %v871, %v869
        %v876 = vcombine.low %v872, %v873
        %v878 = vunpack.c.l.s4 1966171168
        %v879 = vunpack.c.0.s8 %v878
        %v880 = vlaneseq
        %v881 = vshrl.u32 %v880, 7
        %v882 = vsub.s32 %v879, %v881
        %v883 = vrot.slane %v876, %v882
        %v885 = vunpack.c.l.s4 1966171168
        %v886 = vunpack.c.0.s8 %v885
        %v887 = vlaneseq
        %v888 = vshrl.u32 %v887, 7
        %v889 = vsub.s32 %v886, %v888
        %v890 = vrot.slane %v883, %v889
        %v892 = vmul.f32 %v841, %v890
        %s893 = sld [smem:[#allocation3 + $0x23]]
        %v894 = vstv %s893
        %v895 = vmul.f32 %v894, %v867
        %s896 = sld [smem:[#allocation3 + $0x54]]
        %v897 = vstv %s896
        %v898 = vmul.f32 %v897, %v892
        %v899 = vadd.f32 %v895, %v898
        %v900 = vadd.f32 %v791, %v899
        %s901 = sld [smem:[#allocation3 + $0x24]]
        %v902 = vstv %s901
        %v903 = vmul.f32 %v902, %v867
        %s904 = sld [smem:[#allocation3 + $0x55]]
        %v905 = vstv %s904
        %v906 = vmul.f32 %v905, %v892
        %v907 = vadd.f32 %v903, %v906
        %v908 = vadd.f32 %v799, %v907
        %s909 = sld [smem:[#allocation3 + $0x25]]
        %v910 = vstv %s909
        %v911 = vmul.f32 %v910, %v867
        %s912 = sld [smem:[#allocation3 + $0x56]]
        %v913 = vstv %s912
        %v914 = vmul.f32 %v913, %v892
        %v915 = vadd.f32 %v911, %v914
        %v916 = vadd.f32 %v807, %v915
        %s917 = sld [smem:[#allocation3 + $0x26]]
        %v918 = vstv %s917
        %v919 = vmul.f32 %v918, %v867
        %s920 = sld [smem:[#allocation3 + $0x57]]
        %v921 = vstv %s920
        %v922 = vmul.f32 %v921, %v892
        %v923 = vadd.f32 %v919, %v922
        %v924 = vadd.f32 %v815, %v923
        %s925 = sld [smem:[#allocation3 + $0x27]]
        %v926 = vstv %s925
        %v927 = vmul.f32 %v926, %v867
        %s928 = sld [smem:[#allocation3 + $0x58]]
        %v929 = vstv %s928
        %v930 = vmul.f32 %v929, %v892
        %v931 = vadd.f32 %v927, %v930
        %v932 = vadd.f32 %v823, %v931
        %s933 = sld [smem:[#allocation3 + $0x28]]
        %v934 = vstv %s933
        %v935 = vmul.f32 %v934, %v867
        %s936 = sld [smem:[#allocation3 + $0x59]]
        %v937 = vstv %s936
        %v938 = vmul.f32 %v937, %v892
        %v939 = vadd.f32 %v935, %v938
        %v940 = vadd.f32 %v831, %v939
        %s941 = sld [smem:[#allocation3 + $0x29]]
        %v942 = vstv %s941
        %v943 = vmul.f32 %v942, %v867
        %s944 = sld [smem:[#allocation3 + $0x5a]]
        %v945 = vstv %s944
        %v946 = vmul.f32 %v945, %v892
        %v947 = vadd.f32 %v943, %v946
        %v948 = vadd.f32 %v839, %v947
        %s949 = scalar_lea.vmem [#allocation7], 6
        %v950 = vld [vmem:[%s949] ss:$8 sm:$0x3]
        %951 = vrot.lane.b32.xlu0 %v312, 80
        %v952 = vpop.permute.xlu0 %951
        %953 = vrot.lane.b32.xlu0 %v313, 80
        %v954 = vpop.permute.xlu0 %953
        %vm955 = vcmp.lt.s32.totalorder %v320, 80
        %v956 = vsel %vm955, %v952, %v954
        %v957 = vsel %vm955, %v954, %v952
        %v960 = vcombine.low %v956, %v957
        %v962 = vunpack.c.l.s4 1966171168
        %v963 = vunpack.c.0.s8 %v962
        %v964 = vlaneseq
        %v965 = vshrl.u32 %v964, 7
        %v966 = vsub.s32 %v963, %v965
        %v967 = vrot.slane %v960, %v966
        %v969 = vunpack.c.l.s4 1966171168
        %v970 = vunpack.c.0.s8 %v969
        %v971 = vlaneseq
        %v972 = vshrl.u32 %v971, 7
        %v973 = vsub.s32 %v970, %v972
        %v974 = vrot.slane %v967, %v973
        %v976 = vmul.f32 %v950, %v974
        %977 = vrot.lane.b32.xlu0 %v304, 80
        %v978 = vpop.permute.xlu0 %977
        %979 = vrot.lane.b32.xlu0 %v311, 80
        %v980 = vpop.permute.xlu0 %979
        %v981 = vsel %vm955, %v978, %v980
        %v982 = vsel %vm955, %v980, %v978
        %v985 = vcombine.low %v981, %v982
        %v987 = vunpack.c.l.s4 1966171168
        %v988 = vunpack.c.0.s8 %v987
        %v989 = vlaneseq
        %v990 = vshrl.u32 %v989, 7
        %v991 = vsub.s32 %v988, %v990
        %v992 = vrot.slane %v985, %v991
        %v994 = vunpack.c.l.s4 1966171168
        %v995 = vunpack.c.0.s8 %v994
        %v996 = vlaneseq
        %v997 = vshrl.u32 %v996, 7
        %v998 = vsub.s32 %v995, %v997
        %v999 = vrot.slane %v992, %v998
        %v1001 = vmul.f32 %v950, %v999
        %s1002 = sld [smem:[#allocation3 + $0x2a]]
        %v1003 = vstv %s1002
        %v1004 = vmul.f32 %v1003, %v976
        %s1005 = sld [smem:[#allocation3 + $0x5b]]
        %v1006 = vstv %s1005
        %v1007 = vmul.f32 %v1006, %v1001
        %v1008 = vadd.f32 %v1004, %v1007
        %v1009 = vadd.f32 %v900, %v1008
        %s1010 = sld [smem:[#allocation3 + $0x2b]]
        %v1011 = vstv %s1010
        %v1012 = vmul.f32 %v1011, %v976
        %s1013 = sld [smem:[#allocation3 + $0x5c]]
        %v1014 = vstv %s1013
        %v1015 = vmul.f32 %v1014, %v1001
        %v1016 = vadd.f32 %v1012, %v1015
        %v1017 = vadd.f32 %v908, %v1016
        %s1018 = sld [smem:[#allocation3 + $0x2c]]
        %v1019 = vstv %s1018
        %v1020 = vmul.f32 %v1019, %v976
        %s1021 = sld [smem:[#allocation3 + $0x5d]]
        %v1022 = vstv %s1021
        %v1023 = vmul.f32 %v1022, %v1001
        %v1024 = vadd.f32 %v1020, %v1023
        %v1025 = vadd.f32 %v916, %v1024
        %s1026 = sld [smem:[#allocation3 + $0x2d]]
        %v1027 = vstv %s1026
        %v1028 = vmul.f32 %v1027, %v976
        %s1029 = sld [smem:[#allocation3 + $0x5e]]
        %v1030 = vstv %s1029
        %v1031 = vmul.f32 %v1030, %v1001
        %v1032 = vadd.f32 %v1028, %v1031
        %v1033 = vadd.f32 %v924, %v1032
        %s1034 = sld [smem:[#allocation3 + $0x2e]]
        %v1035 = vstv %s1034
        %v1036 = vmul.f32 %v1035, %v976
        %s1037 = sld [smem:[#allocation3 + $0x5f]]
        %v1038 = vstv %s1037
        %v1039 = vmul.f32 %v1038, %v1001
        %v1040 = vadd.f32 %v1036, %v1039
        %v1041 = vadd.f32 %v932, %v1040
        %s1042 = sld [smem:[#allocation3 + $0x2f]]
        %v1043 = vstv %s1042
        %v1044 = vmul.f32 %v1043, %v976
        %s1045 = sld [smem:[#allocation3 + $0x60]]
        %v1046 = vstv %s1045
        %v1047 = vmul.f32 %v1046, %v1001
        %v1048 = vadd.f32 %v1044, %v1047
        %v1049 = vadd.f32 %v940, %v1048
        %s1050 = sld [smem:[#allocation3 + $0x30]]
        %v1051 = vstv %s1050
        %v1052 = vmul.f32 %v1051, %v976
        %s1053 = sld [smem:[#allocation3 + $0x61]]
        %v1054 = vstv %s1053
        %v1055 = vmul.f32 %v1054, %v1001
        %v1056 = vadd.f32 %v1052, %v1055
        %v1057 = vadd.f32 %v948, %v1056
        %v1058 = vld [vmem:[#allocation8] ss:$8 sm:$0x3]
        %v1060 = vlaneseq
        %v1061 = vshrl.u32 %v1060, 7
        %v1062 = vsub.s32 0, %v1061
        %v1063 = vrot.slane %v1009, %v1062
        %v1064 = vlaneseq
        %v1065 = vshrl.u32 %v1064, 7
        %v1066 = vsub.s32 1, %v1065
        %v1067 = vrot.slane %v1009, %v1066
        %1070 = vrot.lane.b32.xlu0 %v1063, 3
        %v1071 = vpop.permute.xlu0 %1070
        %1072 = vrot.lane.b32.xlu0 %v1067, 3
        %v1073 = vpop.permute.xlu0 %1072
        %vm1074 = vcmp.lt.s32.totalorder %v320, 3
        %v1075 = vsel %vm1074, %v1071, %v1073
        %v1076 = vsel %vm1074, %v1073, %v1071
        %v1079 = vcombine.low %v1076, %v1075
        %v1081 = vunpack.c.l.s4 1966171168
        %v1082 = vunpack.c.0.s8 %v1081
        %v1083 = vlaneseq
        %v1084 = vshrl.u32 %v1083, 7
        %v1085 = vsub.s32 %v1082, %v1084
        %v1086 = vrot.slane %v1079, %v1085
        %v1088 = vunpack.c.l.s4 1966171168
        %v1089 = vunpack.c.0.s8 %v1088
        %v1090 = vlaneseq
        %v1091 = vshrl.u32 %v1090, 7
        %v1092 = vsub.s32 %v1089, %v1091
        %v1093 = vrot.slane %v1086, %v1092
        %v1095 = vmul.f32 %v1058, %v1093
        %s1096 = scalar_lea.vmem [#allocation8], 1
        %v1097 = vld [vmem:[%s1096] ss:$8 sm:$0x3]
        %v1099 = vlaneseq
        %v1100 = vshrl.u32 %v1099, 7
        %v1101 = vsub.s32 0, %v1100
        %v1102 = vrot.slane %v1017, %v1101
        %v1103 = vlaneseq
        %v1104 = vshrl.u32 %v1103, 7
        %v1105 = vsub.s32 1, %v1104
        %v1106 = vrot.slane %v1017, %v1105
        %1109 = vrot.lane.b32.xlu0 %v1102, 2
        %v1110 = vpop.permute.xlu0 %1109
        %1111 = vrot.lane.b32.xlu0 %v1106, 2
        %v1112 = vpop.permute.xlu0 %1111
        %vm1113 = vcmp.lt.s32.totalorder %v320, 2
        %v1114 = vsel %vm1113, %v1110, %v1112
        %v1115 = vsel %vm1113, %v1112, %v1110
        %v1118 = vcombine.low %v1115, %v1114
        %v1120 = vunpack.c.l.s4 1966171168
        %v1121 = vunpack.c.0.s8 %v1120
        %v1122 = vlaneseq
        %v1123 = vshrl.u32 %v1122, 7
        %v1124 = vsub.s32 %v1121, %v1123
        %v1125 = vrot.slane %v1118, %v1124
        %v1127 = vunpack.c.l.s4 1966171168
        %v1128 = vunpack.c.0.s8 %v1127
        %v1129 = vlaneseq
        %v1130 = vshrl.u32 %v1129, 7
        %v1131 = vsub.s32 %v1128, %v1130
        %v1132 = vrot.slane %v1125, %v1131
        %v1134 = vmul.f32 %v1097, %v1132
        %s1135 = scalar_lea.vmem [#allocation8], 2
        %v1136 = vld [vmem:[%s1135] ss:$8 sm:$0x3]
        %v1138 = vlaneseq
        %v1139 = vshrl.u32 %v1138, 7
        %v1140 = vsub.s32 0, %v1139
        %v1141 = vrot.slane %v1025, %v1140
        %v1142 = vlaneseq
        %v1143 = vshrl.u32 %v1142, 7
        %v1144 = vsub.s32 1, %v1143
        %v1145 = vrot.slane %v1025, %v1144
        %1148 = vrot.lane.b32.xlu0 %v1141, 1
        %v1149 = vpop.permute.xlu0 %1148
        %1150 = vrot.lane.b32.xlu0 %v1145, 1
        %v1151 = vpop.permute.xlu0 %1150
        %vm1152 = vcmp.lt.s32.totalorder %v320, 1
        %v1153 = vsel %vm1152, %v1149, %v1151
        %v1154 = vsel %vm1152, %v1151, %v1149
        %v1157 = vcombine.low %v1154, %v1153
        %v1159 = vunpack.c.l.s4 1966171168
        %v1160 = vunpack.c.0.s8 %v1159
        %v1161 = vlaneseq
        %v1162 = vshrl.u32 %v1161, 7
        %v1163 = vsub.s32 %v1160, %v1162
        %v1164 = vrot.slane %v1157, %v1163
        %v1166 = vunpack.c.l.s4 1966171168
        %v1167 = vunpack.c.0.s8 %v1166
        %v1168 = vlaneseq
        %v1169 = vshrl.u32 %v1168, 7
        %v1170 = vsub.s32 %v1167, %v1169
        %v1171 = vrot.slane %v1164, %v1170
        %v1173 = vmul.f32 %v1136, %v1171
        %v1174 = vadd.f32 %v1095, %v1173
        %s1175 = scalar_lea.vmem [#allocation8], 3
        %v1176 = vld [vmem:[%s1175] ss:$8 sm:$0x3]
        %v1177 = vmul.f32 %v1176, %v1033
        %v1178 = vadd.f32 %v1134, %v1177
        %s1179 = scalar_lea.vmem [#allocation8], 4
        %v1180 = vld [vmem:[%s1179] ss:$8 sm:$0x3]
        %v1182 = vlaneseq
        %v1183 = vshrl.u32 %v1182, 7
        %v1184 = vsub.s32 0, %v1183
        %v1185 = vrot.slane %v1041, %v1184
        %v1186 = vlaneseq
        %v1187 = vshrl.u32 %v1186, 7
        %v1188 = vsub.s32 1, %v1187
        %v1189 = vrot.slane %v1041, %v1188
        %1192 = vrot.lane.b32.xlu0 %v1185, 127
        %v1193 = vpop.permute.xlu0 %1192
        %1194 = vrot.lane.b32.xlu0 %v1189, 127
        %v1195 = vpop.permute.xlu0 %1194
        %vm1196 = vcmp.lt.s32.totalorder %v320, 127
        %v1197 = vsel %vm1196, %v1193, %v1195
        %v1198 = vsel %vm1196, %v1195, %v1193
        %v1201 = vcombine.low %v1197, %v1198
        %v1203 = vunpack.c.l.s4 1966171168
        %v1204 = vunpack.c.0.s8 %v1203
        %v1205 = vlaneseq
        %v1206 = vshrl.u32 %v1205, 7
        %v1207 = vsub.s32 %v1204, %v1206
        %v1208 = vrot.slane %v1201, %v1207
        %v1210 = vunpack.c.l.s4 1966171168
        %v1211 = vunpack.c.0.s8 %v1210
        %v1212 = vlaneseq
        %v1213 = vshrl.u32 %v1212, 7
        %v1214 = vsub.s32 %v1211, %v1213
        %v1215 = vrot.slane %v1208, %v1214
        %v1217 = vmul.f32 %v1180, %v1215
        %v1218 = vadd.f32 %v1174, %v1217
        %s1219 = scalar_lea.vmem [#allocation8], 5
        %v1220 = vld [vmem:[%s1219] ss:$8 sm:$0x3]
        %v1222 = vlaneseq
        %v1223 = vshrl.u32 %v1222, 7
        %v1224 = vsub.s32 0, %v1223
        %v1225 = vrot.slane %v1049, %v1224
        %v1226 = vlaneseq
        %v1227 = vshrl.u32 %v1226, 7
        %v1228 = vsub.s32 1, %v1227
        %v1229 = vrot.slane %v1049, %v1228
        %1232 = vrot.lane.b32.xlu0 %v1225, 126
        %v1233 = vpop.permute.xlu0 %1232
        %1234 = vrot.lane.b32.xlu0 %v1229, 126
        %v1235 = vpop.permute.xlu0 %1234
        %vm1236 = vcmp.lt.s32.totalorder %v320, 126
        %v1237 = vsel %vm1236, %v1233, %v1235
        %v1238 = vsel %vm1236, %v1235, %v1233
        %v1241 = vcombine.low %v1237, %v1238
        %v1243 = vunpack.c.l.s4 1966171168
        %v1244 = vunpack.c.0.s8 %v1243
        %v1245 = vlaneseq
        %v1246 = vshrl.u32 %v1245, 7
        %v1247 = vsub.s32 %v1244, %v1246
        %v1248 = vrot.slane %v1241, %v1247
        %v1250 = vunpack.c.l.s4 1966171168
        %v1251 = vunpack.c.0.s8 %v1250
        %v1252 = vlaneseq
        %v1253 = vshrl.u32 %v1252, 7
        %v1254 = vsub.s32 %v1251, %v1253
        %v1255 = vrot.slane %v1248, %v1254
        %v1257 = vmul.f32 %v1220, %v1255
        %v1258 = vadd.f32 %v1178, %v1257
        %s1259 = scalar_lea.vmem [#allocation8], 6
        %v1260 = vld [vmem:[%s1259] ss:$8 sm:$0x3]
        %v1262 = vlaneseq
        %v1263 = vshrl.u32 %v1262, 7
        %v1264 = vsub.s32 0, %v1263
        %v1265 = vrot.slane %v1057, %v1264
        %v1266 = vlaneseq
        %v1267 = vshrl.u32 %v1266, 7
        %v1268 = vsub.s32 1, %v1267
        %v1269 = vrot.slane %v1057, %v1268
        %1272 = vrot.lane.b32.xlu0 %v1265, 125
        %v1273 = vpop.permute.xlu0 %1272
        %1274 = vrot.lane.b32.xlu0 %v1269, 125
        %v1275 = vpop.permute.xlu0 %1274
        %vm1276 = vcmp.lt.s32.totalorder %v320, 125
        %v1277 = vsel %vm1276, %v1273, %v1275
        %v1278 = vsel %vm1276, %v1275, %v1273
        %v1281 = vcombine.low %v1277, %v1278
        %v1283 = vunpack.c.l.s4 1966171168
        %v1284 = vunpack.c.0.s8 %v1283
        %v1285 = vlaneseq
        %v1286 = vshrl.u32 %v1285, 7
        %v1287 = vsub.s32 %v1284, %v1286
        %v1288 = vrot.slane %v1281, %v1287
        %v1290 = vunpack.c.l.s4 1966171168
        %v1291 = vunpack.c.0.s8 %v1290
        %v1292 = vlaneseq
        %v1293 = vshrl.u32 %v1292, 7
        %v1294 = vsub.s32 %v1291, %v1293
        %v1295 = vrot.slane %v1288, %v1294
        %v1297 = vmul.f32 %v1260, %v1295
        %v1298 = vadd.f32 %v1218, %v1297
        %v1299 = vadd.f32 %v1298, %v1258
        %s1300 = sld [smem:[#allocation2]]
        %v1301 = vstv %s1300
        %v1302 = vadd.f32 %v1299, %v1301
        %v1303 = vxor.u32 %v1302, 2147483648
        %v1304 = vmul.f32 %v1303, 1.442695
        %v1305 = vpow.pop %v1304
        %v1306 = vadd.f32 %v1305, 1.0
        %v1307 = vrcp.pop %v1306
        %v1308 = vmul.f32 1.0, %v1307
        %v1310 = vlaneseq
        %v1311 = vshrl.u32 %v1310, 7
        %v1312 = vsub.s32 0, %v1311
        %v1313 = vrot.slane %v1308, %v1312
        %v1314 = vlaneseq
        %v1315 = vshrl.u32 %v1314, 7
        %v1316 = vsub.s32 1, %v1315
        %v1317 = vrot.slane %v1308, %v1316
        %v1318 = vcombine.low %v1313, %v1317
        %v1320 = vmul.f32 %v279, %v1318
        %1321 = vst [vmem:[%s278] sm:$0xff] %v1320
        %s1322 = sand.u32 %s141, 1
        %s1323 = scalar_lea.sflag [#allocation5], %s1322
        %s1324 = sand.u32 %s141, 1
        %s1325 = smul.addr %s1324, 8
        %s1326 = scalar_lea.vmem [#allocation11], %s1325
        // Predicated region
        $region57: #{tpu_custom_call.1} parent=39 // pred_check
          %p1327 = pneg %p151
        $region58: #{tpu_custom_call.1} parent=39 // pred_check_branch
          %1329 = sbr.rel (%p1327) target = $region60
        $region59: #{tpu_custom_call.1} parent=39 // pred_region
          %s1331 = ssub.s32 128, 128
          %1332 = vsyncadd %s1323, %s1331
          %s1333 = smul.addr %s23, 2
          %s1334 = smul.addr %s1333, 64
          %s1335 = scalar_lea.hbm %s5, %s1334
          %s1337 = sshll.u32 %s1326, 4
          %s1338 = int_to_ptr.vmem [resolvable:$true] %s1337
          %1340 = dma.vmem_to_hbm [thread:$0]  %s1338, 128, %s1335, %s1323
        $region60: #{tpu_custom_call.1} parent=39 // pred_fallthru
          _
      $region40: #{tpu_custom_call.1} parent=5 // pred_fallthru
        _
      %p1341 = scmp.le.s32.totalorder 2, %s18
      // Predicated region
      $region61: #{tpu_custom_call.1} parent=5 // pred_check
        %p1342 = pneg %p1341
      $region62: #{tpu_custom_call.1} parent=5 // pred_check_branch
        %1344 = sbr.rel (%p1342) target = $region64
      $region63: #{tpu_custom_call.1} parent=5 // pred_region
        %s1345 = ssub.s32 %s18, 2
        // Predicated region
        $region65: #{tpu_custom_call.1} parent=63 // pred_check
          %p1346 = pneg %p157
        $region66: #{tpu_custom_call.1} parent=63 // pred_check_branch
          %1348 = sbr.rel (%p1346) target = $region68
        $region67: #{tpu_custom_call.1} parent=63 // pred_region
          %s1349 = sand.u32 %s142, 1
          %s1350 = scalar_lea.sflag [#allocation5], %s1349
          %s1351 = sand.u32 %s142, 1
          %s1352 = smul.addr %s1351, 8
          %s1353 = scalar_lea.vmem [#allocation11], %s1352
          %1354 = dma.done %s1350, 128
        $region68: #{tpu_custom_call.1} parent=63 // pred_fallthru
          _
      $region64: #{tpu_custom_call.1} parent=5 // pred_fallthru
        _
    $region6: #{tpu_custom_call.1} parent=1 // loop_footer
      %s22 = sadd.s32 1, %s18
    $region7: #{tpu_custom_call.1} parent=1 // loop_footer_branch
      %17 = sbr.rel target = $region3
    $region8: #{tpu_custom_call.1} parent=1 // loop_exit
      _
    %1355 = vsyncpa [#allocation4], 1
    %s1356 = scalar_lea.sflag [#allocation4], 1
    %1357 = vsyncpa %s1356, 1
    %1358 = vsyncpa [#allocation9], 1
    %1359 = vsyncpa [#allocation5], 1
    %s1360 = scalar_lea.sflag [#allocation5], 1
    %1361 = vsyncpa %s1360, 1
    %1362 = vsyncpa [#allocation6], 1
    %s1363 = scalar_lea.sflag [#allocation6], 1
    %1364 = vsyncpa %s1363, 1

</llo_original>
